<compile_context>
chip_gen: v7x
topology: tpu7x:2x2x1
jax: 0.10.0
libtpu: 0.0.40
codegen_flags: <defaults>
</compile_context>

<pallas_src>
import math
import functools

import jax
import jax.numpy as jnp
from jax import lax
from jax.experimental import pallas as pl
from jax.experimental.pallas import tpu as pltpu


# ----------------------------- small helpers --------------------------------

def _gelu_exact(x):
    # erf-based GELU, matches torch.nn.functional.gelu default.
    return 0.5 * x * (1.0 + lax.erf(x * 0.7071067811865476))


def _round_up(x, m):
    return ((x + m - 1) // m) * m


def _pick_divisor_tile(total, target, granule):
    """Largest multiple of `granule` that divides `total`, capped at `target`.
    Falls back to the full dimension if `total` is not a multiple of `granule`."""
    if total % granule != 0:
        return total
    best = granule
    t = granule
    cap = min(target, total)
    while t <= cap:
        if total % t == 0:
            best = t
        t += granule
    return best


def _vmem_capacity_bytes():
    try:
        return int(pltpu.get_tpu_info().vmem_capacity_bytes)
    except Exception:
        return 64 << 20  # conservative (v7x-sized) fallback


def _auto_tile_rows(dtype_bytes):
    """Row tile sized against the per-generation HBM/MXU roofline knee:
    ~311 rows on v7x (64 MiB VMEM), ~680 on v6e (128 MiB)."""
    cap = _vmem_capacity_bytes()
    rows = 512 if cap <= (80 << 20) else 768
    if dtype_bytes >= 4:  # f32 activations: keep roughly the same byte footprint
        rows //= 2
    return rows


# ------------------------------- kernels -------------------------------------

def hidden_kernel(x_ref, w1_ref, b1_ref, g_ref, be_ref, h_ref, acc_ref,
                  *, activation: str, eps: float):
    """hidden = LayerNorm(activation(x @ W1 + b1)); W1 streamed over the K axis."""
    k = pl.program_id(1)

    @pl.when(k == 0)
    def _init():
        acc_ref[...] = jnp.zeros_like(acc_ref)

    # (TM, TK) @ (TK, D) on the MXU, f32 accumulation; operands keep native dtype.
    acc_ref[...] += jnp.dot(x_ref[...], w1_ref[...],
                            preferred_element_type=jnp.float32)

    @pl.when(k == pl.num_programs(1) - 1)
    def _finalize():
        h = acc_ref[...] + b1_ref[...]
        if activation == "relu":
            h = jnp.maximum(h, 0.0)
        else:  # "gelu" (validated in the wrapper)
            h = _gelu_exact(h)
        # LayerNorm over D in f32.  Note: padded (all-zero) rows get var == 0;
        # rsqrt(var + eps) stays finite for any eps > 0 and those rows are
        # sliced away by the caller.
        mean = jnp.mean(h, axis=-1, keepdims=True)
        c = h - mean
        var = jnp.mean(c * c, axis=-1, keepdims=True)
        hn = c * lax.rsqrt(var + eps)
        hn = hn * g_ref[...] + be_ref[...]
        h_ref[...] = hn.astype(h_ref.dtype)


def vocab_kernel(h_ref, w2_ref, b2_ref, o_ref):
    """logits tile = hidden_tile @ W2_tile + b2_tile (lane-dense output store)."""
    out = jnp.dot(h_ref[...], w2_ref[...], preferred_element_type=jnp.float32)
    out = out + b2_ref[...]
    o_ref[...] = out.astype(o_ref.dtype)


# ------------------------------- wrapper --------------------------------------

def lmhead_forward(x, params, *, activation="gelu", eps=1e-5, vocab_size=None,
                   tile_rows=None, tile_vocab=512, tile_k=512, out_dtype=None):
    """x: (batch, seq, dim) -> logits (batch, seq, vocab_size)."""
    if activation not in ("relu", "gelu"):
        raise ValueError(f"Unsupported activation function: {activation}")

    B, S, D = x.shape
    w1_t, b1, gamma, beta, w2_t, b2 = params  # weights pre-transposed to (in, out)
    V_padded = w2_t.shape[1]
    V = int(vocab_size) if vocab_size is not None else V_padded
    out_dtype = jnp.dtype(out_dtype) if out_dtype is not None else x.dtype
    hidden_dtype = w2_t.dtype  # hidden is an MXU operand against W2 -> match it
    N = B * S

    # Cold path: caller handed unpadded vocab weights.  init_lmhead_params pads once.
    if V_padded % 128 != 0:
        # TODO(synk): pad the vocab weight once at init instead of per call.
        Vp = _round_up(V_padded, 128)
        w2_t = jnp.pad(w2_t, ((0, 0), (0, Vp - V_padded)))
        b2 = jnp.pad(b2, ((0, 0), (0, Vp - V_padded)))
        V_padded = Vp

    # --- tile selection ------------------------------------------------------
    xb = jnp.dtype(x.dtype).itemsize
    wb1 = jnp.dtype(w1_t.dtype).itemsize
    wb2 = jnp.dtype(w2_t.dtype).itemsize
    hb = jnp.dtype(hidden_dtype).itemsize
    ob = jnp.dtype(out_dtype).itemsize
    sublane = max(8, 32 // min(xb, hb))

    if tile_rows is None:
        tile_rows = _auto_tile_rows(max(xb, hb))
    TM = min(int(tile_rows), _round_up(N, sublane))
    TM = _round_up(TM, sublane)
    TK = _pick_divisor_tile(D, int(tile_k), 128)          # K slab of W1
    TN = _pick_divisor_tile(V_padded, int(tile_vocab), 128)  # vocab tile

    cap = _vmem_capacity_bytes()
    budget = int(0.80 * cap)

    def _est_a(tm):  # hidden kernel tile footprint (double-buffered streams)
        return (2 * tm * TK * xb + 2 * TK * D * wb1 + 2 * 3 * D * 4
                + 2 * tm * D * hb + tm * D * 4)

    def _est_b(tm):  # vocab-projection kernel tile footprint
        return 2 * tm * D * hb + 2 * (D + 1) * TN * wb2 + 2 * tm * TN * ob

    # Clamp TM so both kernels fit the real device VMEM (with headroom).
    while TM > sublane and int(max(_est_a(TM), _est_b(TM)) * 1.4) + (2 << 20) > budget:
        TM = max(sublane, _round_up(TM // 2, sublane))
        if TM == sublane:
            break

    N_pad = _round_up(N, TM)

    def _vmem_limit(est):
        return int(min(max(est * 1.5 + (4 << 20), 32 << 20), 0.85 * cap))

    vmem_a = _vmem_limit(_est_a(TM))
    vmem_b = _vmem_limit(_est_b(TM))

    x2 = x.reshape(N, D)
    if N_pad != N:
        x2 = jnp.pad(x2, ((0, N_pad - N), (0, 0)))

    # --- kernel A: hidden = LayerNorm(act(x @ W1 + b1)), W1 streamed in K-slabs
    hidden = pl.pallas_call(
        functools.partial(hidden_kernel, activation=activation, eps=float(eps)),
        out_shape=jax.ShapeDtypeStruct((N_pad, D), hidden_dtype),
        grid_spec=pltpu.PrefetchScalarGridSpec(
            num_scalar_prefetch=0,
            grid=(N_pad // TM, D // TK),          # (row tiles, K slabs)
            in_specs=[
                pl.BlockSpec((TM, TK), lambda i, k: (i, k)),   # x slab
                pl.BlockSpec((TK, D), lambda i, k: (k, 0)),    # W1^T K-slab (streamed)
                pl.BlockSpec((1, D), lambda i, k: (0, 0)),     # b1
                pl.BlockSpec((1, D), lambda i, k: (0, 0)),     # LN gamma
                pl.BlockSpec((1, D), lambda i, k: (0, 0)),     # LN beta
            ],
            out_specs=pl.BlockSpec((TM, D), lambda i, k: (i, 0)),
            scratch_shapes=[pltpu.VMEM((TM, D), jnp.float32)],  # f32 accumulator
        ),
        compiler_params=pltpu.CompilerParams(
            dimension_semantics=("parallel", "arbitrary"),
            vmem_limit_bytes=vmem_a,
        ),
        cost_estimate=pl.CostEstimate(
            flops=int(2 * N_pad * D * D),
            transcendentals=int(N_pad * D if activation == "gelu" else N_pad),
            bytes_accessed=int(N_pad * D * xb + (N_pad // TM) * D * D * wb1
                               + N_pad * D * hb),
        ),
    )(x2, w1_t, b1, gamma, beta)

    # --- kernel B: logits = hidden @ W2 + b2 (pure rows x vocab projection) ---
    out2 = pl.pallas_call(
        vocab_kernel,
        out_shape=jax.ShapeDtypeStruct((N_pad, V_padded), out_dtype),
        grid_spec=pltpu.PrefetchScalarGridSpec(
            num_scalar_prefetch=0,
            grid=(N_pad // TM, V_padded // TN),   # (row tiles, vocab tiles)
            in_specs=[
                pl.BlockSpec((TM, D), lambda i, j: (i, 0)),   # hidden (resident across j)
                pl.BlockSpec((D, TN), lambda i, j: (0, j)),   # W2^T tile (streamed)
                pl.BlockSpec((1, TN), lambda i, j: (0, j)),   # b2 tile
            ],
            out_specs=pl.BlockSpec((TM, TN), lambda i, j: (i, j)),
        ),
        compiler_params=pltpu.CompilerParams(
            # No carried state -> both axes parallel; vocab can be sharded
            # across TensorCores (important for small-N decode on v7x).
            dimension_semantics=("parallel", "parallel"),
            vmem_limit_bytes=vmem_b,
        ),
        cost_estimate=pl.CostEstimate(
            flops=int(2 * N_pad * D * V_padded),
            transcendentals=0,
            bytes_accessed=int(N_pad * D * hb + (N_pad // TM) * D * V_padded * wb2
                               + N_pad * V_padded * ob),
        ),
    )(hidden, w2_t, b2)

    return out2[:N, :V].reshape(B, S, V)


# ------------------------- params / reference / demo --------------------------

def init_lmhead_params(key, dim, output_tokens, dtype=jnp.float32):
    """Synthetic init mirroring nn.Linear / nn.LayerNorm.  Weights pre-transposed
    to (in, out), biases as (1, out) rows, and the vocab dim padded ONCE (zeros)
    to a multiple of 128 so the forward pass never pads the big W2 per call."""
    k1, k2, k3, k4 = jax.random.split(key, 4)
    bound = 1.0 / math.sqrt(dim)
    w1 = jax.random.uniform(k1, (dim, dim), jnp.float32, -bound, bound)       # (out, in)
    b1 = jax.random.uniform(k2, (dim,), jnp.float32, -bound, bound)
    gamma = jnp.ones((dim,), jnp.float32)
    beta = jnp.zeros((dim,), jnp.float32)
    w2 = jax.random.uniform(k3, (output_tokens, dim), jnp.float32, -bound, bound)
    b2 = jax.random.uniform(k4, (output_tokens,), jnp.float32, -bound, bound)
    vpad = _round_up(output_tokens, 128) - output_tokens
    params = (
        w1.T,
        b1[None, :],
        gamma[None, :],
        beta[None, :],
        jnp.pad(w2.T, ((0, 0), (0, vpad))),
        jnp.pad(b2[None, :], ((0, 0), (0, vpad))),
    )
    return tuple(p.astype(dtype) for p in params)


def lmhead_reference(x, params, vocab_size, *, activation="gelu", eps=1e-5):
    w1_t, b1, gamma, beta, w2_t, b2 = [p.astype(jnp.float32) for p in params]
    h = x.astype(jnp.float32) @ w1_t + b1[0]
    h = jax.nn.gelu(h, approximate=False) if activation == "gelu" else jnp.maximum(h, 0.0)
    mu = h.mean(-1, keepdims=True)
    var = ((h - mu) ** 2).mean(-1, keepdims=True)
    hn = (h - mu) * lax.rsqrt(var + eps) * gamma[0] + beta[0]
    logits = hn @ w2_t + b2[0]
    return logits[..., :vocab_size]


if __name__ == "__main__":
    # Small shapes that still exercise: row padding (200 -> 256), multiple row
    # tiles, K-slab streaming of W1 (D=256 with TK=128), multiple vocab tiles,
    # and the pre-padded vocab columns (1000 -> 1024).
    B, S, D, V = 2, 100, 256, 1000

    key = jax.random.PRNGKey(0)
    kx, kp = jax.random.split(key)
    x = jax.random.normal(kx, (B, S, D), jnp.float32)
    params = init_lmhead_params(kp, D, V, dtype=jnp.float32)
    ref_gelu = lmhead_reference(x, params, V, activation="gelu")

    # f32 path (tight check).
    for act in ("gelu", "relu"):
        out = lmhead_forward(x, params, activation=act, vocab_size=V,
                             tile_rows=128, tile_vocab=512, tile_k=128)
        out = jax.block_until_ready(out)
        ref = lmhead_reference(x, params, V, activation=act)
        assert out.shape == (B, S, V), out.shape
        err = float(jnp.max(jnp.abs(out - ref)))
        assert err < 2e-3, f"{act}: max err {err}"

    # bf16 path: bf16 MXU operands, bf16 hidden intermediate, bf16 logits,
    # auto (per-generation) row tile.
    x_bf16 = x.astype(jnp.bfloat16)
    params_bf16 = tuple(p.astype(jnp.bfloat16) for p in params)
    out_bf16 = lmhead_forward(x_bf16, params_bf16, activation="gelu", vocab_size=V,
                              out_dtype=jnp.bfloat16)
    out_bf16 = jax.block_until_ready(out_bf16)
    assert out_bf16.shape == (B, S, V), out_bf16.shape
    assert out_bf16.dtype == jnp.bfloat16
    err_bf16 = float(jnp.max(jnp.abs(out_bf16.astype(jnp.float32) - ref_gelu)))
    assert err_bf16 < 0.25, f"bf16 max err {err_bf16}"

    print("KERNEL_OK")
</pallas_src>

<mosaic_0001>
module attributes {stable_mosaic.version = 11 : i64} {
  func.func @hidden_kernel(%arg0: i32, %arg1: i32, %arg2: memref<128x128xf32, #tpu.memory_space<vmem>>, %arg3: memref<128x256xf32, #tpu.memory_space<vmem>>, %arg4: memref<1x256xf32, #tpu.memory_space<vmem>>, %arg5: memref<1x256xf32, #tpu.memory_space<vmem>>, %arg6: memref<1x256xf32, #tpu.memory_space<vmem>>, %arg7: memref<128x256xf32, #tpu.memory_space<vmem>>, %arg8: memref<128x256xf32, #tpu.memory_space<vmem>>) attributes {dimension_semantics = [#tpu.dimension_semantics<parallel>, #tpu.dimension_semantics<arbitrary>], iteration_bounds = array<i64: 2, 2>, scalar_prefetch = 0 : i64, scratch_operands = 1 : i64, tpu.core_type = #tpu.core_type<tc>, window_params = [{transform_indices = @transform_0, window_bounds = array<i64: 128, 128>}, {transform_indices = @transform_1, window_bounds = array<i64: 128, 256>}, {pipeline_mode = #tpu.pipeline_mode<synchronous>, transform_indices = @transform_2, window_bounds = array<i64: 1, 256>}, {pipeline_mode = #tpu.pipeline_mode<synchronous>, transform_indices = @transform_3, window_bounds = array<i64: 1, 256>}, {pipeline_mode = #tpu.pipeline_mode<synchronous>, transform_indices = @transform_4, window_bounds = array<i64: 1, 256>}, {transform_indices = @transform_5, window_bounds = array<i64: 128, 256>}]} {
    %c0_i32 = arith.constant 0 : i32
    %0 = arith.cmpi eq, %arg1, %c0_i32 : i32
    %1 = arith.extui %0 : i1 to i32
    %c0_i32_0 = arith.constant 0 : i32
    %2 = arith.cmpi ne, %1, %c0_i32_0 : i32
    scf.if %2 {
      %cst_9 = arith.constant 0.000000e+00 : f32
      %12 = vector.broadcast %cst_9 : f32 to vector<128x256xf32>
      %c0_10 = arith.constant 0 : index
      %c0_11 = arith.constant 0 : index
      %13 = vector.load %arg8[%c0_10, %c0_11] : memref<128x256xf32, #tpu.memory_space<vmem>>, vector<128x256xf32>
      tpu.vector_store %arg8[%c0_10, %c0_11], %12 {strides = array<i32>} : memref<128x256xf32, #tpu.memory_space<vmem>>, vector<128x256xf32>,
    } else {
    }
    %c0 = arith.constant 0 : index
    %c0_1 = arith.constant 0 : index
    %3 = vector.load %arg8[%c0, %c0_1] : memref<128x256xf32, #tpu.memory_space<vmem>>, vector<128x256xf32>
    %c0_2 = arith.constant 0 : index
    %c0_3 = arith.constant 0 : index
    %4 = vector.load %arg2[%c0_2, %c0_3] : memref<128x128xf32, #tpu.memory_space<vmem>>, vector<128x128xf32>
    %c0_4 = arith.constant 0 : index
    %c0_5 = arith.constant 0 : index
    %5 = vector.load %arg3[%c0_4, %c0_5] : memref<128x256xf32, #tpu.memory_space<vmem>>, vector<128x256xf32>
    %cst = arith.constant dense<0.000000e+00> : vector<128x256xf32>
    %6 = tpu.matmul %4, %5, %cst {dimension_numbers = #tpu.dot_dimension_numbers<[1], [0], [0], [1], [0, 0, 1, 1], [], []>} : vector<128x128xf32>, vector<128x256xf32>, vector<128x256xf32> -> vector<128x256xf32>
    %7 = arith.addf %3, %6 : vector<128x256xf32>
    %c0_6 = arith.constant 0 : index
    %c0_7 = arith.constant 0 : index
    %8 = vector.load %arg8[%c0_6, %c0_7] : memref<128x256xf32, #tpu.memory_space<vmem>>, vector<128x256xf32>
    tpu.vector_store %arg8[%c0_6, %c0_7], %7 {strides = array<i32>} : memref<128x256xf32, #tpu.memory_space<vmem>>, vector<128x256xf32>,
    %c1_i32 = arith.constant 1 : i32
    %9 = arith.cmpi eq, %arg1, %c1_i32 : i32
    %10 = arith.extui %9 : i1 to i32
    %c0_i32_8 = arith.constant 0 : i32
    %11 = arith.cmpi ne, %10, %c0_i32_8 : i32
    scf.if %11 {
      %c0_9 = arith.constant 0 : index
      %c0_10 = arith.constant 0 : index
      %12 = vector.load %arg8[%c0_9, %c0_10] : memref<128x256xf32, #tpu.memory_space<vmem>>, vector<128x256xf32>
      %c0_11 = arith.constant 0 : index
      %c0_12 = arith.constant 0 : index
      %13 = vector.load %arg4[%c0_11, %c0_12] : memref<1x256xf32, #tpu.memory_space<vmem>>, vector<1x256xf32>
      %14 = vector.broadcast %13 : vector<1x256xf32> to vector<128x256xf32>
      %15 = arith.addf %12, %14 : vector<128x256xf32>
      %cst_13 = arith.constant 5.000000e-01 : f32
      %16 = vector.broadcast %cst_13 : f32 to vector<128x256xf32>
      %17 = arith.mulf %16, %15 : vector<128x256xf32>
      %cst_14 = arith.constant 0.707106769 : f32
      %18 = vector.broadcast %cst_14 : f32 to vector<128x256xf32>
      %19 = arith.mulf %15, %18 : vector<128x256xf32>
      %20 = math.erf %19 : vector<128x256xf32>
      %cst_15 = arith.constant 1.000000e+00 : f32
      %21 = vector.broadcast %cst_15 : f32 to vector<128x256xf32>
      %22 = arith.addf %21, %20 : vector<128x256xf32>
      %23 = arith.mulf %17, %22 : vector<128x256xf32>
      %cst_16 = arith.constant dense<0.000000e+00> : vector<128xf32>
      %24 = vector.multi_reduction <add>, %23, %cst_16 [1] : vector<128x256xf32> to vector<128xf32>
      %25 = vector.shape_cast %24 : vector<128xf32> to vector<128x1xf32>
      %cst_17 = arith.constant 2.560000e+02 : f32
      %26 = vector.broadcast %cst_17 : f32 to vector<128x1xf32>
      %27 = arith.divf %25, %26 : vector<128x1xf32>
      %28 = vector.broadcast %27 : vector<128x1xf32> to vector<128x256xf32>
      %29 = arith.subf %23, %28 : vector<128x256xf32>
      %30 = arith.mulf %29, %29 : vector<128x256xf32>
      %cst_18 = arith.constant dense<0.000000e+00> : vector<128xf32>
      %31 = vector.multi_reduction <add>, %30, %cst_18 [1] : vector<128x256xf32> to vector<128xf32>
      %32 = vector.shape_cast %31 : vector<128xf32> to vector<128x1xf32>
      %cst_19 = arith.constant 2.560000e+02 : f32
      %33 = vector.broadcast %cst_19 : f32 to vector<128x1xf32>
      %34 = arith.divf %32, %33 : vector<128x1xf32>
      %cst_20 = arith.constant 9.99999974E-6 : f32
      %35 = vector.broadcast %cst_20 : f32 to vector<128x1xf32>
      %36 = arith.addf %34, %35 : vector<128x1xf32>
      %37 = math.rsqrt %36 : vector<128x1xf32>
      %38 = vector.broadcast %37 : vector<128x1xf32> to vector<128x256xf32>
      %39 = arith.mulf %29, %38 : vector<128x256xf32>
      %c0_21 = arith.constant 0 : index
      %c0_22 = arith.constant 0 : index
      %40 = vector.load %arg5[%c0_21, %c0_22] : memref<1x256xf32, #tpu.memory_space<vmem>>, vector<1x256xf32>
      %41 = vector.broadcast %40 : vector<1x256xf32> to vector<128x256xf32>
      %42 = arith.mulf %39, %41 : vector<128x256xf32>
      %c0_23 = arith.constant 0 : index
      %c0_24 = arith.constant 0 : index
      %43 = vector.load %arg6[%c0_23, %c0_24] : memref<1x256xf32, #tpu.memory_space<vmem>>, vector<1x256xf32>
      %44 = vector.broadcast %43 : vector<1x256xf32> to vector<128x256xf32>
      %45 = arith.addf %42, %44 : vector<128x256xf32>
      %c0_25 = arith.constant 0 : index
      %c0_26 = arith.constant 0 : index
      %46 = vector.load %arg7[%c0_25, %c0_26] : memref<128x256xf32, #tpu.memory_space<vmem>>, vector<128x256xf32>
      tpu.vector_store %arg7[%c0_25, %c0_26], %45 {strides = array<i32>} : memref<128x256xf32, #tpu.memory_space<vmem>>, vector<128x256xf32>,
    } else {
    }
    return
  }
  func.func @transform_0(%arg0: i32, %arg1: i32) -> (i32, i32) {
    %c0_i32 = arith.constant 0 : i32
    return %arg0, %arg1 : i32, i32
  }
  func.func @transform_1(%arg0: i32, %arg1: i32) -> (i32, i32) {
    %c0_i32 = arith.constant 0 : i32
    %c0_i32_0 = arith.constant 0 : i32
    return %arg1, %c0_i32 : i32, i32
  }
  func.func @transform_2(%arg0: i32, %arg1: i32) -> (i32, i32) {
    %c0_i32 = arith.constant 0 : i32
    %c0_i32_0 = arith.constant 0 : i32
    %c0_i32_1 = arith.constant 0 : i32
    return %c0_i32, %c0_i32_0 : i32, i32
  }
  func.func @transform_3(%arg0: i32, %arg1: i32) -> (i32, i32) {
    %c0_i32 = arith.constant 0 : i32
    %c0_i32_0 = arith.constant 0 : i32
    %c0_i32_1 = arith.constant 0 : i32
    return %c0_i32, %c0_i32_0 : i32, i32
  }
  func.func @transform_4(%arg0: i32, %arg1: i32) -> (i32, i32) {
    %c0_i32 = arith.constant 0 : i32
    %c0_i32_0 = arith.constant 0 : i32
    %c0_i32_1 = arith.constant 0 : i32
    return %c0_i32, %c0_i32_0 : i32, i32
  }
  func.func @transform_5(%arg0: i32, %arg1: i32) -> (i32, i32) {
    %c0_i32 = arith.constant 0 : i32
    %c0_i32_0 = arith.constant 0 : i32
    return %arg0, %c0_i32 : i32, i32
  }
}

</mosaic_0001>

<llo_original>
// kernel: tpu_custom_call.1
$region0: #{tpu_custom_call.1}
  #allocation0 [shape = 'u32[]', space=smem, size = 0x4, offset = 0x4, fixed_abs, tag = 'smem constant byte address 0x4 - core index']
  #allocation1 [shape = 'u32[144,128]{1,0:T(1,128)}', space=vmem, size = 0x12000, scoped, tag = 'internal scratch']
  #allocation2 [shape = 'f32[128,256]{1,0:T(8,128)}', space=vmem, size = 0x20000, scoped, tag = 'scratch operand']
  %s0 = inlined_call_operand.hbm [shape: f32[256,256], index: 0, kind: input, shape index: {}]
  %s1 = inlined_call_operand.hbm [shape: f32[256,256], index: 1, kind: input, shape index: {}]
  %s2 = inlined_call_operand.vmem [shape: f32[1,256], index: 2, kind: input, shape index: {}]
  %s3 = inlined_call_operand.vmem [shape: f32[1,256], index: 3, kind: input, shape index: {}]
  %s4 = inlined_call_operand.vmem [shape: f32[1,256], index: 4, kind: input, shape index: {}]
  %s5 = inlined_call_operand.hbm [shape: f32[256,256], index: 5, kind: output, shape index: {}]
  %s6 = sld [smem:[#allocation0]]
  $region69: #{tpu_custom_call.1} parent=0
    _
  %s8 = ssub.s32 1, %s6
  %s9 = scalar_select 0, %s8, %s6
  $region1: #{tpu_custom_call.1} parent=0
    #allocation3 [shape = 'u8[131072]{0}', space=vmem, size = 0x20000, scoped, tag = 'input window, operand 0']
    #allocation4 [shape = 's32[2]{0}', space=sflag, size = 0x8, scoped, tag = 'scoped memory for tpu_custom_call.1']
    #allocation5 [shape = 's32[2]{0}', space=sflag, size = 0x8, scoped, tag = 'scoped memory for tpu_custom_call.1']
    #allocation6 [shape = 'u8[262144]{0}', space=vmem, size = 0x40000, scoped, tag = 'input window, operand 1']
    #allocation7 [shape = 's32[2]{0}', space=sflag, size = 0x8, scoped, tag = 'scoped memory for tpu_custom_call.1']
    #allocation8 [shape = 'u8[262144]{0}', space=vmem, size = 0x40000, scoped, tag = 'output window, operand 0']
    %10 = vsyncpa [#allocation4], 0
    %s11 = scalar_lea.sflag [#allocation4], 1
    %12 = vsyncpa %s11, 0
    %13 = vsyncpa [#allocation7], 0
    %s14 = scalar_lea.sflag [#allocation7], 1
    %15 = vsyncpa %s14, 0
    %16 = vsyncpa [#allocation5], 0
    %s17 = scalar_lea.sflag [#allocation5], 1
    %18 = vsyncpa %s17, 0
    loop: start=0, step=1, limit=6
    $region2: #{tpu_custom_call.1} parent=1 // loop_pre_header
      _
    $region3: #{tpu_custom_call.1} parent=1 // loop_header
      %s20 = sphi 0, %s24
      %p21 = scmp.ge.s32.totalorder %s20, 6
      %s27 = sphi 0, %s39
      %s28 = sphi 0, %s35
      %s29 = sphi 0, %s27
      %s30 = sphi 0, %s28
      %s31 = sphi 0, %s29
      %s32 = sphi 0, %s30
      %s44 = sphi 0, %s46
      %s47 = sphi 0, %s44
      %s48 = sphi 0, %s47
      %s64 = sphi 0, %s48
      %s70 = sphi 0, %s72
      %s73 = sphi 0, %s70
      %s74 = sphi 0, %s73
      %s90 = sphi 0, %s74
      %s94 = sphi 0, %s94
      %s96 = sphi 0, %s94
      %s97 = sphi 0, %s96
      %s111 = sphi 0, %s97
      %s115 = sphi 0, %s115
      %s117 = sphi 0, %s115
      %s118 = sphi 0, %s117
      %s132 = sphi 0, %s118
      %s136 = sphi 0, %s136
      %s138 = sphi 0, %s136
      %s139 = sphi 0, %s138
      %s153 = sphi 0, %s139
      %s159 = sphi 0, %s161
      %s162 = sphi 0, %s159
      %s163 = sphi 0, %s162
      %s179 = sphi 0, %s163
    $region4: #{tpu_custom_call.1} parent=1 // loop_header_branch
      %23 = sbr.rel (%p21) target = $region8
    $region5: #{tpu_custom_call.1} parent=1 // loop_body
      %s25 = ssub.s32 %s20, 1
      %s26 = ssub.s32 %s20, 2
      %s33 = sadd.s32 1, %s28
      %p34 = scmp.ge.s32.totalorder %s33, 2
      %s35 = scalar_select %p34, 0, %s33
      %s36 = sadd.s32 1, %s27
      %s37 = scalar_select %p34, %s36, %s27
      %p38 = scmp.ge.s32.totalorder %s37, 2
      %s39 = scalar_select %p38, 0, %s37
      %s40 = ssub.s32 %s27, %s39
      %s41 = ssub.s32 %s28, %s35
      %s42 = sor.u32 %s40, %s41
      %p43 = scmp.eq.s32.totalorder %s42, 0
      %s45 = sadd.s32 %s44, 1
      %s46 = scalar_select %p43, %s44, %s45
      %p49 = pneg %p43
      %p50 = scmp.eq.s32.totalorder %s20, 3
      %p51 = por %p49, %p50
      %p52 = scmp.ne.s32.totalorder %s44, %s47
      %p53 = scmp.eq.s32.totalorder %s20, 0
      %p54 = por %p52, %p53
      %p55 = scmp.ne.s32.totalorder %s44, %s47
      %p56 = scmp.eq.s32.totalorder %s25, 3
      %p57 = por %p55, %p56
      %p58 = scmp.ne.s32.totalorder %s47, %s48
      %p59 = scmp.eq.s32.totalorder %s25, 0
      %p60 = por %p58, %p59
      %p61 = scmp.ne.s32.totalorder %s47, %s48
      %p62 = scmp.eq.s32.totalorder %s26, 3
      %p63 = por %p61, %p62
      %p65 = scmp.ne.s32.totalorder %s48, %s64
      %p66 = scmp.eq.s32.totalorder %s26, 0
      %p67 = por %p65, %p66
      %s68 = ssub.s32 %s28, %s35
      %p69 = scmp.eq.s32.totalorder %s68, 0
      %s71 = sadd.s32 %s70, 1
      %s72 = scalar_select %p69, %s70, %s71
      %p75 = pneg %p69
      %p76 = scmp.eq.s32.totalorder %s20, 3
      %p77 = por %p75, %p76
      %p78 = scmp.ne.s32.totalorder %s70, %s73
      %p79 = scmp.eq.s32.totalorder %s20, 0
      %p80 = por %p78, %p79
      %p81 = scmp.ne.s32.totalorder %s70, %s73
      %p82 = scmp.eq.s32.totalorder %s25, 3
      %p83 = por %p81, %p82
      %p84 = scmp.ne.s32.totalorder %s73, %s74
      %p85 = scmp.eq.s32.totalorder %s25, 0
      %p86 = por %p84, %p85
      %p87 = scmp.ne.s32.totalorder %s73, %s74
      %p88 = scmp.eq.s32.totalorder %s26, 3
      %p89 = por %p87, %p88
      %p91 = scmp.ne.s32.totalorder %s74, %s90
      %p92 = scmp.eq.s32.totalorder %s26, 0
      %p93 = por %p91, %p92
      %s95 = sadd.s32 %s94, 1
      %p98 = scmp.eq.s32.totalorder %s20, 3
      %p99 = scmp.ne.s32.totalorder %s94, %s96
      %p100 = scmp.eq.s32.totalorder %s20, 0
      %p101 = por %p99, %p100
      %p102 = scmp.ne.s32.totalorder %s94, %s96
      %p103 = scmp.eq.s32.totalorder %s25, 3
      %p104 = por %p102, %p103
      %p105 = scmp.ne.s32.totalorder %s96, %s97
      %p106 = scmp.eq.s32.totalorder %s25, 0
      %p107 = por %p105, %p106
      %p108 = scmp.ne.s32.totalorder %s96, %s97
      %p109 = scmp.eq.s32.totalorder %s26, 3
      %p110 = por %p108, %p109
      %p112 = scmp.ne.s32.totalorder %s97, %s111
      %p113 = scmp.eq.s32.totalorder %s26, 0
      %p114 = por %p112, %p113
      %s116 = sadd.s32 %s115, 1
      %p119 = scmp.eq.s32.totalorder %s20, 3
      %p120 = scmp.ne.s32.totalorder %s115, %s117
      %p121 = scmp.eq.s32.totalorder %s20, 0
      %p122 = por %p120, %p121
      %p123 = scmp.ne.s32.totalorder %s115, %s117
      %p124 = scmp.eq.s32.totalorder %s25, 3
      %p125 = por %p123, %p124
      %p126 = scmp.ne.s32.totalorder %s117, %s118
      %p127 = scmp.eq.s32.totalorder %s25, 0
      %p128 = por %p126, %p127
      %p129 = scmp.ne.s32.totalorder %s117, %s118
      %p130 = scmp.eq.s32.totalorder %s26, 3
      %p131 = por %p129, %p130
      %p133 = scmp.ne.s32.totalorder %s118, %s132
      %p134 = scmp.eq.s32.totalorder %s26, 0
      %p135 = por %p133, %p134
      %s137 = sadd.s32 %s136, 1
      %p140 = scmp.eq.s32.totalorder %s20, 3
      %p141 = scmp.ne.s32.totalorder %s136, %s138
      %p142 = scmp.eq.s32.totalorder %s20, 0
      %p143 = por %p141, %p142
      %p144 = scmp.ne.s32.totalorder %s136, %s138
      %p145 = scmp.eq.s32.totalorder %s25, 3
      %p146 = por %p144, %p145
      %p147 = scmp.ne.s32.totalorder %s138, %s139
      %p148 = scmp.eq.s32.totalorder %s25, 0
      %p149 = por %p147, %p148
      %p150 = scmp.ne.s32.totalorder %s138, %s139
      %p151 = scmp.eq.s32.totalorder %s26, 3
      %p152 = por %p150, %p151
      %p154 = scmp.ne.s32.totalorder %s139, %s153
      %p155 = scmp.eq.s32.totalorder %s26, 0
      %p156 = por %p154, %p155
      %s157 = ssub.s32 %s27, %s39
      %p158 = scmp.eq.s32.totalorder %s157, 0
      %s160 = sadd.s32 %s159, 1
      %s161 = scalar_select %p158, %s159, %s160
      %p164 = pneg %p158
      %p165 = scmp.eq.s32.totalorder %s20, 3
      %p166 = por %p164, %p165
      %p167 = scmp.ne.s32.totalorder %s159, %s162
      %p168 = scmp.eq.s32.totalorder %s20, 0
      %p169 = por %p167, %p168
      %p170 = scmp.ne.s32.totalorder %s159, %s162
      %p171 = scmp.eq.s32.totalorder %s25, 3
      %p172 = por %p170, %p171
      %p173 = scmp.ne.s32.totalorder %s162, %s163
      %p174 = scmp.eq.s32.totalorder %s25, 0
      %p175 = por %p173, %p174
      %p176 = scmp.ne.s32.totalorder %s162, %s163
      %p177 = scmp.eq.s32.totalorder %s26, 3
      %p178 = por %p176, %p177
      %p180 = scmp.ne.s32.totalorder %s163, %s179
      %p181 = scmp.eq.s32.totalorder %s26, 0
      %p182 = por %p180, %p181
      %p183 = scmp.le.s32.totalorder 1, %s20
      %p184 = scmp.lt.s32.totalorder %s20, 5
      %p185 = pnand %p183, %p184
      %p186 = pneg %p185
      // Predicated region
      $region9: #{tpu_custom_call.1} parent=5 // pred_check
        _
      $region10: #{tpu_custom_call.1} parent=5 // pred_check_branch
        %188 = sbr.rel (%p185) target = $region12
      $region11: #{tpu_custom_call.1} parent=5 // pred_region
        %s189 = ssub.s32 %s20, 1
        // Predicated region
        $region13: #{tpu_custom_call.1} parent=11 // pred_check
          %p190 = pneg %p107
        $region14: #{tpu_custom_call.1} parent=11 // pred_check_branch
          %192 = sbr.rel (%p190) target = $region16
        $region15: #{tpu_custom_call.1} parent=11 // pred_region
          _
        $region16: #{tpu_custom_call.1} parent=11 // pred_fallthru
          _
        // Predicated region
        $region17: #{tpu_custom_call.1} parent=11 // pred_check
          %p193 = pneg %p128
        $region18: #{tpu_custom_call.1} parent=11 // pred_check_branch
          %195 = sbr.rel (%p193) target = $region20
        $region19: #{tpu_custom_call.1} parent=11 // pred_region
          _
        $region20: #{tpu_custom_call.1} parent=11 // pred_fallthru
          _
        // Predicated region
        $region21: #{tpu_custom_call.1} parent=11 // pred_check
          %p196 = pneg %p149
        $region22: #{tpu_custom_call.1} parent=11 // pred_check_branch
          %198 = sbr.rel (%p196) target = $region24
        $region23: #{tpu_custom_call.1} parent=11 // pred_region
          _
        $region24: #{tpu_custom_call.1} parent=11 // pred_fallthru
          _
      $region12: #{tpu_custom_call.1} parent=5 // pred_fallthru
        _
      %p199 = scmp.lt.s32.totalorder %s20, 4
      // Predicated region
      $region25: #{tpu_custom_call.1} parent=5 // pred_check
        %p200 = pneg %p199
      $region26: #{tpu_custom_call.1} parent=5 // pred_check_branch
        %202 = sbr.rel (%p200) target = $region28
      $region27: #{tpu_custom_call.1} parent=5 // pred_region
        // Predicated region
        $region29: #{tpu_custom_call.1} parent=27 // pred_check
          %p203 = pneg %p54
        $region30: #{tpu_custom_call.1} parent=27 // pred_check_branch
          %205 = sbr.rel (%p203) target = $region32
        $region31: #{tpu_custom_call.1} parent=27 // pred_region
          %s206 = sand.u32 %s44, 1
          %s207 = scalar_lea.sflag [#allocation4], %s206
          %s208 = sand.u32 %s44, 1
          %s209 = smul.addr %s208, 128
          %s210 = scalar_lea.vmem [#allocation3], %s209
          %s211 = smul.u32 16, %s27
          %s213 = ssub.s32 2048, 2048
          %214 = vsyncadd %s207, %s213
          %s215 = smul.addr %s211, 2
          %s216 = sadd.s32 %s28, %s215
          %s217 = smul.addr %s216, 128
          %s218 = scalar_lea.hbm %s0, %s217
          %s219 = sshll.u32 %s210, 4
          %s220 = int_to_ptr.vmem [resolvable:$true] %s219
          %225 = dma.hbm_to_vmem [thread:$0]  %s218, 2048, %s220, %s207, 256, 128, 8
        $region32: #{tpu_custom_call.1} parent=27 // pred_fallthru
          _
        // Predicated region
        $region33: #{tpu_custom_call.1} parent=27 // pred_check
          %p226 = pneg %p80
        $region34: #{tpu_custom_call.1} parent=27 // pred_check_branch
          %228 = sbr.rel (%p226) target = $region36
        $region35: #{tpu_custom_call.1} parent=27 // pred_region
          %s229 = sand.u32 %s70, 1
          %s230 = scalar_lea.sflag [#allocation7], %s229
          %s231 = sand.u32 %s70, 1
          %s232 = smul.addr %s231, 256
          %s233 = scalar_lea.vmem [#allocation6], %s232
          %s234 = smul.u32 16, %s28
          %s236 = ssub.s32 4096, 4096
          %237 = vsyncadd %s230, %s236
          %s238 = smul.addr %s234, 2
          %s239 = smul.addr %s238, 128
          %s240 = scalar_lea.hbm %s1, %s239
          %s241 = sshll.u32 %s233, 4
          %s242 = int_to_ptr.vmem [resolvable:$true] %s241
          %247 = dma.hbm_to_vmem [thread:$0]  %s240, 4096, %s242, %s230, 256, 256, 16
        $region36: #{tpu_custom_call.1} parent=27 // pred_fallthru
          _
      $region28: #{tpu_custom_call.1} parent=5 // pred_fallthru
        _
      %p248 = scmp.le.s32.totalorder 1, %s20
      %p249 = scmp.lt.s32.totalorder %s20, 5
      %p250 = pnand %p248, %p249
      %p251 = pneg %p250
      // Predicated region
      $region37: #{tpu_custom_call.1} parent=5 // pred_check
        _
      $region38: #{tpu_custom_call.1} parent=5 // pred_check_branch
        %253 = sbr.rel (%p250) target = $region40
      $region39: #{tpu_custom_call.1} parent=5 // pred_region
        %s254 = ssub.s32 %s20, 1
        %s255 = sand.u32 %s47, 1
        %s256 = scalar_lea.sflag [#allocation4], %s255
        %s257 = sand.u32 %s47, 1
        %s258 = smul.addr %s257, 128
        %s259 = scalar_lea.vmem [#allocation3], %s258
        // Predicated region
        $region41: #{tpu_custom_call.1} parent=39 // pred_check
          %p260 = pneg %p60
        $region42: #{tpu_custom_call.1} parent=39 // pred_check_branch
          %262 = sbr.rel (%p260) target = $region44
        $region43: #{tpu_custom_call.1} parent=39 // pred_region
          %263 = dma.done %s256, 2048
        $region44: #{tpu_custom_call.1} parent=39 // pred_fallthru
          _
        %s264 = sand.u32 %s73, 1
        %s265 = scalar_lea.sflag [#allocation7], %s264
        %s266 = sand.u32 %s73, 1
        %s267 = smul.addr %s266, 256
        %s268 = scalar_lea.vmem [#allocation6], %s267
        // Predicated region
        $region45: #{tpu_custom_call.1} parent=39 // pred_check
          %p269 = pneg %p86
        $region46: #{tpu_custom_call.1} parent=39 // pred_check_branch
          %271 = sbr.rel (%p269) target = $region48
        $region47: #{tpu_custom_call.1} parent=39 // pred_region
          %272 = dma.done %s265, 4096
        $region48: #{tpu_custom_call.1} parent=39 // pred_fallthru
          _
        %s273 = sand.u32 %s47, 1
        %s274 = scalar_lea.sflag [#allocation4], %s273
        %s275 = sand.u32 %s47, 1
        %s276 = smul.addr %s275, 128
        %s277 = scalar_lea.vmem [#allocation3], %s276
        %p278 = pneg %p60
        %p279 = pneg %p57
        %s280 = sand.u32 %s73, 1
        %s281 = scalar_lea.sflag [#allocation7], %s280
        %s282 = sand.u32 %s73, 1
        %s283 = smul.addr %s282, 256
        %s284 = scalar_lea.vmem [#allocation6], %s283
        %p285 = pneg %p86
        %p286 = pneg %p83
        %p287 = pneg %p107
        %p288 = pneg %p104
        %p289 = pneg %p128
        %p290 = pneg %p125
        %p291 = pneg %p149
        %p292 = pneg %p146
        %p293 = pneg %p175
        %p294 = pneg %p172
        %s295 = sand.u32 %s162, 1
        %s296 = scalar_lea.sflag [#allocation5], %s295
        %s297 = sand.u32 %s162, 1
        %s298 = smul.addr %s297, 256
        %s299 = scalar_lea.vmem [#allocation8], %s298
        %s300 = smul.u32 16, %s29
        %s301 = smul.u32 16, %s30
        %s302 = smul.u32 16, %s29
        %p303 = scmp.eq.s32.totalorder %s30, 0
        // Predicated region
        $region49: #{tpu_custom_call.1} parent=39 // pred_check
          %p304 = pneg %p303
        $region50: #{tpu_custom_call.1} parent=39 // pred_check_branch
          %306 = sbr.rel (%p304) target = $region52
        $region51: #{tpu_custom_call.1} parent=39 // pred_region
          %307 = vst [vmem:[#allocation2] sm:$0xff] 0.0
          %308 = vst [vmem:[#allocation2 + $0x8] sm:$0xff] 0.0
          %309 = vst [vmem:[#allocation2 + $0x10] sm:$0xff] 0.0
          %310 = vst [vmem:[#allocation2 + $0x18] sm:$0xff] 0.0
          %311 = vst [vmem:[#allocation2 + $0x20] sm:$0xff] 0.0
          %312 = vst [vmem:[#allocation2 + $0x28] sm:$0xff] 0.0
          %313 = vst [vmem:[#allocation2 + $0x30] sm:$0xff] 0.0
          %314 = vst [vmem:[#allocation2 + $0x38] sm:$0xff] 0.0
          %315 = vst [vmem:[#allocation2 + $0x40] sm:$0xff] 0.0
          %316 = vst [vmem:[#allocation2 + $0x48] sm:$0xff] 0.0
          %317 = vst [vmem:[#allocation2 + $0x50] sm:$0xff] 0.0
          %318 = vst [vmem:[#allocation2 + $0x58] sm:$0xff] 0.0
          %319 = vst [vmem:[#allocation2 + $0x60] sm:$0xff] 0.0
          %320 = vst [vmem:[#allocation2 + $0x68] sm:$0xff] 0.0
          %321 = vst [vmem:[#allocation2 + $0x70] sm:$0xff] 0.0
          %322 = vst [vmem:[#allocation2 + $0x78] sm:$0xff] 0.0
          %323 = vst [vmem:[#allocation2 + $0x80] sm:$0xff] 0.0
          %324 = vst [vmem:[#allocation2 + $0x88] sm:$0xff] 0.0
          %325 = vst [vmem:[#allocation2 + $0x90] sm:$0xff] 0.0
          %326 = vst [vmem:[#allocation2 + $0x98] sm:$0xff] 0.0
          %327 = vst [vmem:[#allocation2 + $0xa0] sm:$0xff] 0.0
          %328 = vst [vmem:[#allocation2 + $0xa8] sm:$0xff] 0.0
          %329 = vst [vmem:[#allocation2 + $0xb0] sm:$0xff] 0.0
          %330 = vst [vmem:[#allocation2 + $0xb8] sm:$0xff] 0.0
          %331 = vst [vmem:[#allocation2 + $0xc0] sm:$0xff] 0.0
          %332 = vst [vmem:[#allocation2 + $0xc8] sm:$0xff] 0.0
          %333 = vst [vmem:[#allocation2 + $0xd0] sm:$0xff] 0.0
          %334 = vst [vmem:[#allocation2 + $0xd8] sm:$0xff] 0.0
          %335 = vst [vmem:[#allocation2 + $0xe0] sm:$0xff] 0.0
          %336 = vst [vmem:[#allocation2 + $0xe8] sm:$0xff] 0.0
          %337 = vst [vmem:[#allocation2 + $0xf0] sm:$0xff] 0.0
          %338 = vst [vmem:[#allocation2 + $0xf8] sm:$0xff] 0.0
        $region52: #{tpu_custom_call.1} parent=39 // pred_fallthru
          _
        %v339 = vld [vmem:[#allocation2] sm:$0xff]
        %v340 = vld [vmem:[#allocation2 + $0x8] sm:$0xff]
        %v341 = vld [vmem:[#allocation2 + $0x10] sm:$0xff]
        %v342 = vld [vmem:[#allocation2 + $0x18] sm:$0xff]
        %v343 = vld [vmem:[#allocation2 + $0x20] sm:$0xff]
        %v344 = vld [vmem:[#allocation2 + $0x28] sm:$0xff]
        %v345 = vld [vmem:[#allocation2 + $0x30] sm:$0xff]
        %v346 = vld [vmem:[#allocation2 + $0x38] sm:$0xff]
        %v347 = vld [vmem:[#allocation2 + $0x40] sm:$0xff]
        %v348 = vld [vmem:[#allocation2 + $0x48] sm:$0xff]
        %v349 = vld [vmem:[#allocation2 + $0x50] sm:$0xff]
        %v350 = vld [vmem:[#allocation2 + $0x58] sm:$0xff]
        %v351 = vld [vmem:[#allocation2 + $0x60] sm:$0xff]
        %v352 = vld [vmem:[#allocation2 + $0x68] sm:$0xff]
        %v353 = vld [vmem:[#allocation2 + $0x70] sm:$0xff]
        %v354 = vld [vmem:[#allocation2 + $0x78] sm:$0xff]
        %v355 = vld [vmem:[#allocation2 + $0x80] sm:$0xff]
        %v356 = vld [vmem:[#allocation2 + $0x88] sm:$0xff]
        %v357 = vld [vmem:[#allocation2 + $0x90] sm:$0xff]
        %v358 = vld [vmem:[#allocation2 + $0x98] sm:$0xff]
        %v359 = vld [vmem:[#allocation2 + $0xa0] sm:$0xff]
        %v360 = vld [vmem:[#allocation2 + $0xa8] sm:$0xff]
        %v361 = vld [vmem:[#allocation2 + $0xb0] sm:$0xff]
        %v362 = vld [vmem:[#allocation2 + $0xb8] sm:$0xff]
        %v363 = vld [vmem:[#allocation2 + $0xc0] sm:$0xff]
        %v364 = vld [vmem:[#allocation2 + $0xc8] sm:$0xff]
        %v365 = vld [vmem:[#allocation2 + $0xd0] sm:$0xff]
        %v366 = vld [vmem:[#allocation2 + $0xd8] sm:$0xff]
        %v367 = vld [vmem:[#allocation2 + $0xe0] sm:$0xff]
        %v368 = vld [vmem:[#allocation2 + $0xe8] sm:$0xff]
        %v369 = vld [vmem:[#allocation2 + $0xf0] sm:$0xff]
        %v370 = vld [vmem:[#allocation2 + $0xf8] sm:$0xff]
        %v371 = vld [vmem:[%s259] sm:$0xff]
        %v372 = vld [vmem:[%s259 + $0x8] sm:$0xff]
        %v373 = vld [vmem:[%s259 + $0x10] sm:$0xff]
        %v374 = vld [vmem:[%s259 + $0x18] sm:$0xff]
        %v375 = vld [vmem:[%s259 + $0x20] sm:$0xff]
        %v376 = vld [vmem:[%s259 + $0x28] sm:$0xff]
        %v377 = vld [vmem:[%s259 + $0x30] sm:$0xff]
        %v378 = vld [vmem:[%s259 + $0x38] sm:$0xff]
        %v379 = vld [vmem:[%s259 + $0x40] sm:$0xff]
        %v380 = vld [vmem:[%s259 + $0x48] sm:$0xff]
        %v381 = vld [vmem:[%s259 + $0x50] sm:$0xff]
        %v382 = vld [vmem:[%s259 + $0x58] sm:$0xff]
        %v383 = vld [vmem:[%s259 + $0x60] sm:$0xff]
        %v384 = vld [vmem:[%s259 + $0x68] sm:$0xff]
        %v385 = vld [vmem:[%s259 + $0x70] sm:$0xff]
        %v386 = vld [vmem:[%s259 + $0x78] sm:$0xff]
        %v387 = vld [vmem:[%s268] sm:$0xff]
        %v388 = vld [vmem:[%s268 + $0x8] sm:$0xff]
        %v389 = vld [vmem:[%s268 + $0x10] sm:$0xff]
        %v390 = vld [vmem:[%s268 + $0x18] sm:$0xff]
        %v391 = vld [vmem:[%s268 + $0x20] sm:$0xff]
        %v392 = vld [vmem:[%s268 + $0x28] sm:$0xff]
        %v393 = vld [vmem:[%s268 + $0x30] sm:$0xff]
        %v394 = vld [vmem:[%s268 + $0x38] sm:$0xff]
        %v395 = vld [vmem:[%s268 + $0x40] sm:$0xff]
        %v396 = vld [vmem:[%s268 + $0x48] sm:$0xff]
        %v397 = vld [vmem:[%s268 + $0x50] sm:$0xff]
        %v398 = vld [vmem:[%s268 + $0x58] sm:$0xff]
        %v399 = vld [vmem:[%s268 + $0x60] sm:$0xff]
        %v400 = vld [vmem:[%s268 + $0x68] sm:$0xff]
        %v401 = vld [vmem:[%s268 + $0x70] sm:$0xff]
        %v402 = vld [vmem:[%s268 + $0x78] sm:$0xff]
        %v403 = vld [vmem:[%s268 + $0x80] sm:$0xff]
        %v404 = vld [vmem:[%s268 + $0x88] sm:$0xff]
        %v405 = vld [vmem:[%s268 + $0x90] sm:$0xff]
        %v406 = vld [vmem:[%s268 + $0x98] sm:$0xff]
        %v407 = vld [vmem:[%s268 + $0xa0] sm:$0xff]
        %v408 = vld [vmem:[%s268 + $0xa8] sm:$0xff]
        %v409 = vld [vmem:[%s268 + $0xb0] sm:$0xff]
        %v410 = vld [vmem:[%s268 + $0xb8] sm:$0xff]
        %v411 = vld [vmem:[%s268 + $0xc0] sm:$0xff]
        %v412 = vld [vmem:[%s268 + $0xc8] sm:$0xff]
        %v413 = vld [vmem:[%s268 + $0xd0] sm:$0xff]
        %v414 = vld [vmem:[%s268 + $0xd8] sm:$0xff]
        %v415 = vld [vmem:[%s268 + $0xe0] sm:$0xff]
        %v416 = vld [vmem:[%s268 + $0xe8] sm:$0xff]
        %v417 = vld [vmem:[%s268 + $0xf0] sm:$0xff]
        %v418 = vld [vmem:[%s268 + $0xf8] sm:$0xff]
        %419 = vmatprep.subr.mxu0 %v388
        %420 = vmatpush1.msra.mxu0 %v387
        %421 = vmatprep.subr.mxu0 %v390
        %422 = vmatpush1.msra.mxu0 %v389
        %423 = vmatprep.subr.mxu0 %v392
        %424 = vmatpush1.msra.mxu0 %v391
        %425 = vmatprep.subr.mxu0 %v394
        %426 = vmatpush1.msra.mxu0 %v393
        %427 = vmatprep.subr.mxu0 %v396
        %428 = vmatpush1.msra.mxu0 %v395
        %429 = vmatprep.subr.mxu0 %v398
        %430 = vmatpush1.msra.mxu0 %v397
        %431 = vmatprep.subr.mxu0 %v400
        %432 = vmatpush1.msra.mxu0 %v399
        %433 = vmatprep.subr.mxu0 %v402
        %434 = vmatpush1.msra.mxu0 %v401
        %435 = vmatprep.subr.mxu0 %v404
        %436 = vmatpush1.msra.mxu0 %v403
        %437 = vmatprep.subr.mxu0 %v406
        %438 = vmatpush1.msra.mxu0 %v405
        %439 = vmatprep.subr.mxu0 %v408
        %440 = vmatpush1.msra.mxu0 %v407
        %441 = vmatprep.subr.mxu0 %v410
        %442 = vmatpush1.msra.mxu0 %v409
        %443 = vmatprep.subr.mxu0 %v412
        %444 = vmatpush1.msra.mxu0 %v411
        %445 = vmatprep.subr.mxu0 %v414
        %446 = vmatpush1.msra.mxu0 %v413
        %447 = vmatprep.subr.mxu0 %v416
        %448 = vmatpush1.msra.mxu0 %v415
        %449 = vmatprep.subr.mxu0 %v418
        %450 = vmatpush1.msra.mxu0 %v417
        %451 = vmatprep.subr.mxu0 0.0
        %452 = vmatpush1.msra.mxu0 0.0
        %453 = vmatprep.subr.mxu0 0.0
        %454 = vmatpush1.msra.mxu0 0.0
        %455 = vmatprep.subr.mxu0 0.0
        %456 = vmatpush1.msra.mxu0 0.0
        %457 = vmatprep.subr.mxu0 0.0
        %458 = vmatpush1.msra.mxu0 0.0
        %459 = vmatprep.subr.mxu0 0.0
        %460 = vmatpush1.msra.mxu0 0.0
        %461 = vmatprep.subr.mxu0 0.0
        %462 = vmatpush1.msra.mxu0 0.0
        %463 = vmatprep.subr.mxu0 0.0
        %464 = vmatpush1.msra.mxu0 0.0
        %465 = vmatprep.subr.mxu0 0.0
        %466 = vmatpush1.msra.mxu0 0.0
        %467 = vmatprep.subr.mxu0 0.0
        %468 = vmatpush1.msra.mxu0 0.0
        %469 = vmatprep.subr.mxu0 0.0
        %470 = vmatpush1.msra.mxu0 0.0
        %471 = vmatprep.subr.mxu0 0.0
        %472 = vmatpush1.msra.mxu0 0.0
        %473 = vmatprep.subr.mxu0 0.0
        %474 = vmatpush1.msra.mxu0 0.0
        %475 = vmatprep.subr.mxu0 0.0
        %476 = vmatpush1.msra.mxu0 0.0
        %477 = vmatprep.subr.mxu0 0.0
        %478 = vmatpush1.msra.mxu0 0.0
        %479 = vmatprep.subr.mxu0 0.0
        %480 = vmatpush1.msra.mxu0 0.0
        %481 = vmatprep.subr.mxu0 0.0
        %482 = vmatpush1.msra.mxu0 0.0
        %483 = vmatprep.mubr.f32.mxu0 0.0
        %484 = vmatmul.mubr.f32.gmra.mrb[0].mxu0 %v371
        %v485 = vpop.f32.mrb[0].mxu0
        %v486 = vadd.f32 0.0, %v485
        %v487 = vpop.f32.mrb[0].mxu0
        %v488 = vadd.f32 0.0, %v487
        %489 = vmatprep.mubr.f32.mxu0 0.0
        %490 = vmatmul.mubr.f32.gmra.mrb[0].mxu0 %v372
        %v491 = vpop.f32.mrb[0].mxu0
        %v492 = vadd.f32 0.0, %v491
        %v493 = vpop.f32.mrb[0].mxu0
        %v494 = vadd.f32 0.0, %v493
        %495 = vmatprep.mubr.f32.mxu0 0.0
        %496 = vmatmul.mubr.f32.gmra.mrb[0].mxu0 %v373
        %v497 = vpop.f32.mrb[0].mxu0
        %v498 = vadd.f32 0.0, %v497
        %v499 = vpop.f32.mrb[0].mxu0
        %v500 = vadd.f32 0.0, %v499
        %501 = vmatprep.mubr.f32.mxu0 0.0
        %502 = vmatmul.mubr.f32.gmra.mrb[0].mxu0 %v374
        %v503 = vpop.f32.mrb[0].mxu0
        %v504 = vadd.f32 0.0, %v503
        %v505 = vpop.f32.mrb[0].mxu0
        %v506 = vadd.f32 0.0, %v505
        %507 = vmatprep.mubr.f32.mxu0 0.0
        %508 = vmatmul.mubr.f32.gmra.mrb[0].mxu0 %v375
        %v509 = vpop.f32.mrb[0].mxu0
        %v510 = vadd.f32 0.0, %v509
        %v511 = vpop.f32.mrb[0].mxu0
        %v512 = vadd.f32 0.0, %v511
        %513 = vmatprep.mubr.f32.mxu0 0.0
        %514 = vmatmul.mubr.f32.gmra.mrb[0].mxu0 %v376
        %v515 = vpop.f32.mrb[0].mxu0
        %v516 = vadd.f32 0.0, %v515
        %v517 = vpop.f32.mrb[0].mxu0
        %v518 = vadd.f32 0.0, %v517
        %519 = vmatprep.mubr.f32.mxu0 0.0
        %520 = vmatmul.mubr.f32.gmra.mrb[0].mxu0 %v377
        %v521 = vpop.f32.mrb[0].mxu0
        %v522 = vadd.f32 0.0, %v521
        %v523 = vpop.f32.mrb[0].mxu0
        %v524 = vadd.f32 0.0, %v523
        %525 = vmatprep.mubr.f32.mxu0 0.0
        %526 = vmatmul.mubr.f32.gmra.mrb[0].mxu0 %v378
        %v527 = vpop.f32.mrb[0].mxu0
        %v528 = vadd.f32 0.0, %v527
        %v529 = vpop.f32.mrb[0].mxu0
        %v530 = vadd.f32 0.0, %v529
        %531 = vmatprep.mubr.f32.mxu0 0.0
        %532 = vmatmul.mubr.f32.gmra.mrb[0].mxu0 %v379
        %v533 = vpop.f32.mrb[0].mxu0
        %v534 = vadd.f32 0.0, %v533
        %v535 = vpop.f32.mrb[0].mxu0
        %v536 = vadd.f32 0.0, %v535
        %537 = vmatprep.mubr.f32.mxu0 0.0
        %538 = vmatmul.mubr.f32.gmra.mrb[0].mxu0 %v380
        %v539 = vpop.f32.mrb[0].mxu0
        %v540 = vadd.f32 0.0, %v539
        %v541 = vpop.f32.mrb[0].mxu0
        %v542 = vadd.f32 0.0, %v541
        %543 = vmatprep.mubr.f32.mxu0 0.0
        %544 = vmatmul.mubr.f32.gmra.mrb[0].mxu0 %v381
        %v545 = vpop.f32.mrb[0].mxu0
        %v546 = vadd.f32 0.0, %v545
        %v547 = vpop.f32.mrb[0].mxu0
        %v548 = vadd.f32 0.0, %v547
        %549 = vmatprep.mubr.f32.mxu0 0.0
        %550 = vmatmul.mubr.f32.gmra.mrb[0].mxu0 %v382
        %v551 = vpop.f32.mrb[0].mxu0
        %v552 = vadd.f32 0.0, %v551
        %v553 = vpop.f32.mrb[0].mxu0
        %v554 = vadd.f32 0.0, %v553
        %555 = vmatprep.mubr.f32.mxu0 0.0
        %556 = vmatmul.mubr.f32.gmra.mrb[0].mxu0 %v383
        %v557 = vpop.f32.mrb[0].mxu0
        %v558 = vadd.f32 0.0, %v557
        %v559 = vpop.f32.mrb[0].mxu0
        %v560 = vadd.f32 0.0, %v559
        %561 = vmatprep.mubr.f32.mxu0 0.0
        %562 = vmatmul.mubr.f32.gmra.mrb[0].mxu0 %v384
        %v563 = vpop.f32.mrb[0].mxu0
        %v564 = vadd.f32 0.0, %v563
        %v565 = vpop.f32.mrb[0].mxu0
        %v566 = vadd.f32 0.0, %v565
        %567 = vmatprep.mubr.f32.mxu0 0.0
        %568 = vmatmul.mubr.f32.gmra.mrb[0].mxu0 %v385
        %v569 = vpop.f32.mrb[0].mxu0
        %v570 = vadd.f32 0.0, %v569
        %v571 = vpop.f32.mrb[0].mxu0
        %v572 = vadd.f32 0.0, %v571
        %573 = vmatprep.mubr.f32.mxu0 0.0
        %574 = vmatmul.mubr.f32.gmra.mrb[0].mxu0 %v386
        %v575 = vpop.f32.mrb[0].mxu0
        %v576 = vadd.f32 0.0, %v575
        %v577 = vpop.f32.mrb[0].mxu0
        %v578 = vadd.f32 0.0, %v577
        %579 = vdwg.mxu0
        %v580 = vadd.f32 %v339, %v486
        %v581 = vadd.f32 %v340, %v488
        %v582 = vadd.f32 %v341, %v492
        %v583 = vadd.f32 %v342, %v494
        %v584 = vadd.f32 %v343, %v498
        %v585 = vadd.f32 %v344, %v500
        %v586 = vadd.f32 %v345, %v504
        %v587 = vadd.f32 %v346, %v506
        %v588 = vadd.f32 %v347, %v510
        %v589 = vadd.f32 %v348, %v512
        %v590 = vadd.f32 %v349, %v516
        %v591 = vadd.f32 %v350, %v518
        %v592 = vadd.f32 %v351, %v522
        %v593 = vadd.f32 %v352, %v524
        %v594 = vadd.f32 %v353, %v528
        %v595 = vadd.f32 %v354, %v530
        %v596 = vadd.f32 %v355, %v534
        %v597 = vadd.f32 %v356, %v536
        %v598 = vadd.f32 %v357, %v540
        %v599 = vadd.f32 %v358, %v542
        %v600 = vadd.f32 %v359, %v546
        %v601 = vadd.f32 %v360, %v548
        %v602 = vadd.f32 %v361, %v552
        %v603 = vadd.f32 %v362, %v554
        %v604 = vadd.f32 %v363, %v558
        %v605 = vadd.f32 %v364, %v560
        %v606 = vadd.f32 %v365, %v564
        %v607 = vadd.f32 %v366, %v566
        %v608 = vadd.f32 %v367, %v570
        %v609 = vadd.f32 %v368, %v572
        %v610 = vadd.f32 %v369, %v576
        %v611 = vadd.f32 %v370, %v578
        %612 = vst [vmem:[#allocation2] sm:$0xff] %v580
        %613 = vst [vmem:[#allocation2 + $0x8] sm:$0xff] %v581
        %614 = vst [vmem:[#allocation2 + $0x10] sm:$0xff] %v582
        %615 = vst [vmem:[#allocation2 + $0x18] sm:$0xff] %v583
        %616 = vst [vmem:[#allocation2 + $0x20] sm:$0xff] %v584
        %617 = vst [vmem:[#allocation2 + $0x28] sm:$0xff] %v585
        %618 = vst [vmem:[#allocation2 + $0x30] sm:$0xff] %v586
        %619 = vst [vmem:[#allocation2 + $0x38] sm:$0xff] %v587
        %620 = vst [vmem:[#allocation2 + $0x40] sm:$0xff] %v588
        %621 = vst [vmem:[#allocation2 + $0x48] sm:$0xff] %v589
        %622 = vst [vmem:[#allocation2 + $0x50] sm:$0xff] %v590
        %623 = vst [vmem:[#allocation2 + $0x58] sm:$0xff] %v591
        %624 = vst [vmem:[#allocation2 + $0x60] sm:$0xff] %v592
        %625 = vst [vmem:[#allocation2 + $0x68] sm:$0xff] %v593
        %626 = vst [vmem:[#allocation2 + $0x70] sm:$0xff] %v594
        %627 = vst [vmem:[#allocation2 + $0x78] sm:$0xff] %v595
        %628 = vst [vmem:[#allocation2 + $0x80] sm:$0xff] %v596
        %629 = vst [vmem:[#allocation2 + $0x88] sm:$0xff] %v597
        %630 = vst [vmem:[#allocation2 + $0x90] sm:$0xff] %v598
        %631 = vst [vmem:[#allocation2 + $0x98] sm:$0xff] %v599
        %632 = vst [vmem:[#allocation2 + $0xa0] sm:$0xff] %v600
        %633 = vst [vmem:[#allocation2 + $0xa8] sm:$0xff] %v601
        %634 = vst [vmem:[#allocation2 + $0xb0] sm:$0xff] %v602
        %635 = vst [vmem:[#allocation2 + $0xb8] sm:$0xff] %v603
        %636 = vst [vmem:[#allocation2 + $0xc0] sm:$0xff] %v604
        %637 = vst [vmem:[#allocation2 + $0xc8] sm:$0xff] %v605
        %638 = vst [vmem:[#allocation2 + $0xd0] sm:$0xff] %v606
        %639 = vst [vmem:[#allocation2 + $0xd8] sm:$0xff] %v607
        %640 = vst [vmem:[#allocation2 + $0xe0] sm:$0xff] %v608
        %641 = vst [vmem:[#allocation2 + $0xe8] sm:$0xff] %v609
        %642 = vst [vmem:[#allocation2 + $0xf0] sm:$0xff] %v610
        %643 = vst [vmem:[#allocation2 + $0xf8] sm:$0xff] %v611
        %p644 = scmp.eq.s32.totalorder %s30, 1
        // Predicated region
        $region53: #{tpu_custom_call.1} parent=39 // pred_check
          %p645 = pneg %p644
        $region54: #{tpu_custom_call.1} parent=39 // pred_check_branch
          %647 = sbr.rel (%p645) target = $region56
        $region55: #{tpu_custom_call.1} parent=39 // pred_region
          %v648 = vld [vmem:[#allocation2] sm:$0xff]
          %v649 = vld [vmem:[#allocation2 + $0x8] sm:$0xff]
          %v650 = vld [vmem:[#allocation2 + $0x10] sm:$0xff]
          %v651 = vld [vmem:[#allocation2 + $0x18] sm:$0xff]
          %v652 = vld [vmem:[#allocation2 + $0x20] sm:$0xff]
          %v653 = vld [vmem:[#allocation2 + $0x28] sm:$0xff]
          %v654 = vld [vmem:[#allocation2 + $0x30] sm:$0xff]
          %v655 = vld [vmem:[#allocation2 + $0x38] sm:$0xff]
          %v656 = vld [vmem:[#allocation2 + $0x40] sm:$0xff]
          %v657 = vld [vmem:[#allocation2 + $0x48] sm:$0xff]
          %v658 = vld [vmem:[#allocation2 + $0x50] sm:$0xff]
          %v659 = vld [vmem:[#allocation2 + $0x58] sm:$0xff]
          %v660 = vld [vmem:[#allocation2 + $0x60] sm:$0xff]
          %v661 = vld [vmem:[#allocation2 + $0x68] sm:$0xff]
          %v662 = vld [vmem:[#allocation2 + $0x70] sm:$0xff]
          %v663 = vld [vmem:[#allocation2 + $0x78] sm:$0xff]
          %v664 = vld [vmem:[#allocation2 + $0x80] sm:$0xff]
          %v665 = vld [vmem:[#allocation2 + $0x88] sm:$0xff]
          %v666 = vld [vmem:[#allocation2 + $0x90] sm:$0xff]
          %v667 = vld [vmem:[#allocation2 + $0x98] sm:$0xff]
          %v668 = vld [vmem:[#allocation2 + $0xa0] sm:$0xff]
          %v669 = vld [vmem:[#allocation2 + $0xa8] sm:$0xff]
          %v670 = vld [vmem:[#allocation2 + $0xb0] sm:$0xff]
          %v671 = vld [vmem:[#allocation2 + $0xb8] sm:$0xff]
          %v672 = vld [vmem:[#allocation2 + $0xc0] sm:$0xff]
          %v673 = vld [vmem:[#allocation2 + $0xc8] sm:$0xff]
          %v674 = vld [vmem:[#allocation2 + $0xd0] sm:$0xff]
          %v675 = vld [vmem:[#allocation2 + $0xd8] sm:$0xff]
          %v676 = vld [vmem:[#allocation2 + $0xe0] sm:$0xff]
          %v677 = vld [vmem:[#allocation2 + $0xe8] sm:$0xff]
          %v678 = vld [vmem:[#allocation2 + $0xf0] sm:$0xff]
          %v679 = vld [vmem:[#allocation2 + $0xf8] sm:$0xff]
          %v680 = vld [vmem:[%s2] sm:$0x3]
          %v682 = vlaneseq
          %v683 = vshrl.u32 %v682, 7
          %v684 = vsub.s32 0, %v683
          %v685 = vrot.slane %v680, %v684
          %v686 = vlaneseq
          %v687 = vshrl.u32 %v686, 7
          %v688 = vsub.s32 1, %v687
          %v689 = vrot.slane %v680, %v688
          %v692 = vadd.f32 %v648, %v685
          %v693 = vadd.f32 %v649, %v689
          %v694 = vadd.f32 %v650, %v685
          %v695 = vadd.f32 %v651, %v689
          %v696 = vadd.f32 %v652, %v685
          %v697 = vadd.f32 %v653, %v689
          %v698 = vadd.f32 %v654, %v685
          %v699 = vadd.f32 %v655, %v689
          %v700 = vadd.f32 %v656, %v685
          %v701 = vadd.f32 %v657, %v689
          %v702 = vadd.f32 %v658, %v685
          %v703 = vadd.f32 %v659, %v689
          %v704 = vadd.f32 %v660, %v685
          %v705 = vadd.f32 %v661, %v689
          %v706 = vadd.f32 %v662, %v685
          %v707 = vadd.f32 %v663, %v689
          %v708 = vadd.f32 %v664, %v685
          %v709 = vadd.f32 %v665, %v689
          %v710 = vadd.f32 %v666, %v685
          %v711 = vadd.f32 %v667, %v689
          %v712 = vadd.f32 %v668, %v685
          %v713 = vadd.f32 %v669, %v689
          %v714 = vadd.f32 %v670, %v685
          %v715 = vadd.f32 %v671, %v689
          %v716 = vadd.f32 %v672, %v685
          %v717 = vadd.f32 %v673, %v689
          %v718 = vadd.f32 %v674, %v685
          %v719 = vadd.f32 %v675, %v689
          %v720 = vadd.f32 %v676, %v685
          %v721 = vadd.f32 %v677, %v689
          %v722 = vadd.f32 %v678, %v685
          %v723 = vadd.f32 %v679, %v689
          %v724 = vmul.f32 %v692, 0.5
          %v725 = vmul.f32 %v693, 0.5
          %v726 = vmul.f32 %v694, 0.5
          %v727 = vmul.f32 %v695, 0.5
          %v728 = vmul.f32 %v696, 0.5
          %v729 = vmul.f32 %v697, 0.5
          %v730 = vmul.f32 %v698, 0.5
          %v731 = vmul.f32 %v699, 0.5
          %v732 = vmul.f32 %v700, 0.5
          %v733 = vmul.f32 %v701, 0.5
          %v734 = vmul.f32 %v702, 0.5
          %v735 = vmul.f32 %v703, 0.5
          %v736 = vmul.f32 %v704, 0.5
          %v737 = vmul.f32 %v705, 0.5
          %v738 = vmul.f32 %v706, 0.5
          %v739 = vmul.f32 %v707, 0.5
          %v740 = vmul.f32 %v708, 0.5
          %v741 = vmul.f32 %v709, 0.5
          %v742 = vmul.f32 %v710, 0.5
          %v743 = vmul.f32 %v711, 0.5
          %v744 = vmul.f32 %v712, 0.5
          %v745 = vmul.f32 %v713, 0.5
          %v746 = vmul.f32 %v714, 0.5
          %v747 = vmul.f32 %v715, 0.5
          %v748 = vmul.f32 %v716, 0.5
          %v749 = vmul.f32 %v717, 0.5
          %v750 = vmul.f32 %v718, 0.5
          %v751 = vmul.f32 %v719, 0.5
          %v752 = vmul.f32 %v720, 0.5
          %v753 = vmul.f32 %v721, 0.5
          %v754 = vmul.f32 %v722, 0.5
          %v755 = vmul.f32 %v723, 0.5
          %v756 = vmul.f32 %v692, 0.70710677
          %v757 = vmul.f32 %v693, 0.70710677
          %v758 = vmul.f32 %v694, 0.70710677
          %v759 = vmul.f32 %v695, 0.70710677
          %v760 = vmul.f32 %v696, 0.70710677
          %v761 = vmul.f32 %v697, 0.70710677
          %v762 = vmul.f32 %v698, 0.70710677
          %v763 = vmul.f32 %v699, 0.70710677
          %v764 = vmul.f32 %v700, 0.70710677
          %v765 = vmul.f32 %v701, 0.70710677
          %v766 = vmul.f32 %v702, 0.70710677
          %v767 = vmul.f32 %v703, 0.70710677
          %v768 = vmul.f32 %v704, 0.70710677
          %v769 = vmul.f32 %v705, 0.70710677
          %v770 = vmul.f32 %v706, 0.70710677
          %v771 = vmul.f32 %v707, 0.70710677
          %v772 = vmul.f32 %v708, 0.70710677
          %v773 = vmul.f32 %v709, 0.70710677
          %v774 = vmul.f32 %v710, 0.70710677
          %v775 = vmul.f32 %v711, 0.70710677
          %v776 = vmul.f32 %v712, 0.70710677
          %v777 = vmul.f32 %v713, 0.70710677
          %v778 = vmul.f32 %v714, 0.70710677
          %v779 = vmul.f32 %v715, 0.70710677
          %v780 = vmul.f32 %v716, 0.70710677
          %v781 = vmul.f32 %v717, 0.70710677
          %v782 = vmul.f32 %v718, 0.70710677
          %v783 = vmul.f32 %v719, 0.70710677
          %v784 = vmul.f32 %v720, 0.70710677
          %v785 = vmul.f32 %v721, 0.70710677
          %v786 = vmul.f32 %v722, 0.70710677
          %v787 = vmul.f32 %v723, 0.70710677
          %v788 = verf.f32.pop %v756
          %v789 = verf.f32.pop %v757
          %v790 = verf.f32.pop %v758
          %v791 = verf.f32.pop %v759
          %v792 = verf.f32.pop %v760
          %v793 = verf.f32.pop %v761
          %v794 = verf.f32.pop %v762
          %v795 = verf.f32.pop %v763
          %v796 = verf.f32.pop %v764
          %v797 = verf.f32.pop %v765
          %v798 = verf.f32.pop %v766
          %v799 = verf.f32.pop %v767
          %v800 = verf.f32.pop %v768
          %v801 = verf.f32.pop %v769
          %v802 = verf.f32.pop %v770
          %v803 = verf.f32.pop %v771
          %v804 = verf.f32.pop %v772
          %v805 = verf.f32.pop %v773
          %v806 = verf.f32.pop %v774
          %v807 = verf.f32.pop %v775
          %v808 = verf.f32.pop %v776
          %v809 = verf.f32.pop %v777
          %v810 = verf.f32.pop %v778
          %v811 = verf.f32.pop %v779
          %v812 = verf.f32.pop %v780
          %v813 = verf.f32.pop %v781
          %v814 = verf.f32.pop %v782
          %v815 = verf.f32.pop %v783
          %v816 = verf.f32.pop %v784
          %v817 = verf.f32.pop %v785
          %v818 = verf.f32.pop %v786
          %v819 = verf.f32.pop %v787
          %v820 = vadd.f32 %v788, 1.0
          %v821 = vadd.f32 %v789, 1.0
          %v822 = vadd.f32 %v790, 1.0
          %v823 = vadd.f32 %v791, 1.0
          %v824 = vadd.f32 %v792, 1.0
          %v825 = vadd.f32 %v793, 1.0
          %v826 = vadd.f32 %v794, 1.0
          %v827 = vadd.f32 %v795, 1.0
          %v828 = vadd.f32 %v796, 1.0
          %v829 = vadd.f32 %v797, 1.0
          %v830 = vadd.f32 %v798, 1.0
          %v831 = vadd.f32 %v799, 1.0
          %v832 = vadd.f32 %v800, 1.0
          %v833 = vadd.f32 %v801, 1.0
          %v834 = vadd.f32 %v802, 1.0
          %v835 = vadd.f32 %v803, 1.0
          %v836 = vadd.f32 %v804, 1.0
          %v837 = vadd.f32 %v805, 1.0
          %v838 = vadd.f32 %v806, 1.0
          %v839 = vadd.f32 %v807, 1.0
          %v840 = vadd.f32 %v808, 1.0
          %v841 = vadd.f32 %v809, 1.0
          %v842 = vadd.f32 %v810, 1.0
          %v843 = vadd.f32 %v811, 1.0
          %v844 = vadd.f32 %v812, 1.0
          %v845 = vadd.f32 %v813, 1.0
          %v846 = vadd.f32 %v814, 1.0
          %v847 = vadd.f32 %v815, 1.0
          %v848 = vadd.f32 %v816, 1.0
          %v849 = vadd.f32 %v817, 1.0
          %v850 = vadd.f32 %v818, 1.0
          %v851 = vadd.f32 %v819, 1.0
          %v852 = vmul.f32 %v724, %v820
          %v853 = vmul.f32 %v725, %v821
          %v854 = vmul.f32 %v726, %v822
          %v855 = vmul.f32 %v727, %v823
          %v856 = vmul.f32 %v728, %v824
          %v857 = vmul.f32 %v729, %v825
          %v858 = vmul.f32 %v730, %v826
          %v859 = vmul.f32 %v731, %v827
          %v860 = vmul.f32 %v732, %v828
          %v861 = vmul.f32 %v733, %v829
          %v862 = vmul.f32 %v734, %v830
          %v863 = vmul.f32 %v735, %v831
          %v864 = vmul.f32 %v736, %v832
          %v865 = vmul.f32 %v737, %v833
          %v866 = vmul.f32 %v738, %v834
          %v867 = vmul.f32 %v739, %v835
          %v868 = vmul.f32 %v740, %v836
          %v869 = vmul.f32 %v741, %v837
          %v870 = vmul.f32 %v742, %v838
          %v871 = vmul.f32 %v743, %v839
          %v872 = vmul.f32 %v744, %v840
          %v873 = vmul.f32 %v745, %v841
          %v874 = vmul.f32 %v746, %v842
          %v875 = vmul.f32 %v747, %v843
          %v876 = vmul.f32 %v748, %v844
          %v877 = vmul.f32 %v749, %v845
          %v878 = vmul.f32 %v750, %v846
          %v879 = vmul.f32 %v751, %v847
          %v880 = vmul.f32 %v752, %v848
          %v881 = vmul.f32 %v753, %v849
          %v882 = vmul.f32 %v754, %v850
          %v883 = vmul.f32 %v755, %v851
          %v884 = vadd.f32 %v852, %v853
          %885 = vadd.xlane.f32.xlu0 %v884
          %v886 = vpop.xlane.xlu0 %885
          %v887 = vadd.f32 %v854, %v855
          %888 = vadd.xlane.f32.xlu0 %v887
          %v889 = vpop.xlane.xlu0 %888
          %v890 = vadd.f32 %v856, %v857
          %891 = vadd.xlane.f32.xlu0 %v890
          %v892 = vpop.xlane.xlu0 %891
          %v893 = vadd.f32 %v858, %v859
          %894 = vadd.xlane.f32.xlu0 %v893
          %v895 = vpop.xlane.xlu0 %894
          %v896 = vadd.f32 %v860, %v861
          %897 = vadd.xlane.f32.xlu0 %v896
          %v898 = vpop.xlane.xlu0 %897
          %v899 = vadd.f32 %v862, %v863
          %900 = vadd.xlane.f32.xlu0 %v899
          %v901 = vpop.xlane.xlu0 %900
          %v902 = vadd.f32 %v864, %v865
          %903 = vadd.xlane.f32.xlu0 %v902
          %v904 = vpop.xlane.xlu0 %903
          %v905 = vadd.f32 %v866, %v867
          %906 = vadd.xlane.f32.xlu0 %v905
          %v907 = vpop.xlane.xlu0 %906
          %v908 = vadd.f32 %v868, %v869
          %909 = vadd.xlane.f32.xlu0 %v908
          %v910 = vpop.xlane.xlu0 %909
          %v911 = vadd.f32 %v870, %v871
          %912 = vadd.xlane.f32.xlu0 %v911
          %v913 = vpop.xlane.xlu0 %912
          %v914 = vadd.f32 %v872, %v873
          %915 = vadd.xlane.f32.xlu0 %v914
          %v916 = vpop.xlane.xlu0 %915
          %v917 = vadd.f32 %v874, %v875
          %918 = vadd.xlane.f32.xlu0 %v917
          %v919 = vpop.xlane.xlu0 %918
          %v920 = vadd.f32 %v876, %v877
          %921 = vadd.xlane.f32.xlu0 %v920
          %v922 = vpop.xlane.xlu0 %921
          %v923 = vadd.f32 %v878, %v879
          %924 = vadd.xlane.f32.xlu0 %v923
          %v925 = vpop.xlane.xlu0 %924
          %v926 = vadd.f32 %v880, %v881
          %927 = vadd.xlane.f32.xlu0 %v926
          %v928 = vpop.xlane.xlu0 %927
          %v929 = vadd.f32 %v882, %v883
          %930 = vadd.xlane.f32.xlu0 %v929
          %v931 = vpop.xlane.xlu0 %930
          %v932 = vrcp.pop 256.0
          %v933 = vmul.f32 %v886, %v932
          %v934 = vmul.f32 %v889, %v932
          %v935 = vmul.f32 %v892, %v932
          %v936 = vmul.f32 %v895, %v932
          %v937 = vmul.f32 %v898, %v932
          %v938 = vmul.f32 %v901, %v932
          %v939 = vmul.f32 %v904, %v932
          %v940 = vmul.f32 %v907, %v932
          %v941 = vmul.f32 %v910, %v932
          %v942 = vmul.f32 %v913, %v932
          %v943 = vmul.f32 %v916, %v932
          %v944 = vmul.f32 %v919, %v932
          %v945 = vmul.f32 %v922, %v932
          %v946 = vmul.f32 %v925, %v932
          %v947 = vmul.f32 %v928, %v932
          %v948 = vmul.f32 %v931, %v932
          %v949 = vsub.f32 %v852, %v933
          %v950 = vsub.f32 %v853, %v933
          %v951 = vsub.f32 %v854, %v934
          %v952 = vsub.f32 %v855, %v934
          %v953 = vsub.f32 %v856, %v935
          %v954 = vsub.f32 %v857, %v935
          %v955 = vsub.f32 %v858, %v936
          %v956 = vsub.f32 %v859, %v936
          %v957 = vsub.f32 %v860, %v937
          %v958 = vsub.f32 %v861, %v937
          %v959 = vsub.f32 %v862, %v938
          %v960 = vsub.f32 %v863, %v938
          %v961 = vsub.f32 %v864, %v939
          %v962 = vsub.f32 %v865, %v939
          %v963 = vsub.f32 %v866, %v940
          %v964 = vsub.f32 %v867, %v940
          %v965 = vsub.f32 %v868, %v941
          %v966 = vsub.f32 %v869, %v941
          %v967 = vsub.f32 %v870, %v942
          %v968 = vsub.f32 %v871, %v942
          %v969 = vsub.f32 %v872, %v943
          %v970 = vsub.f32 %v873, %v943
          %v971 = vsub.f32 %v874, %v944
          %v972 = vsub.f32 %v875, %v944
          %v973 = vsub.f32 %v876, %v945
          %v974 = vsub.f32 %v877, %v945
          %v975 = vsub.f32 %v878, %v946
          %v976 = vsub.f32 %v879, %v946
          %v977 = vsub.f32 %v880, %v947
          %v978 = vsub.f32 %v881, %v947
          %v979 = vsub.f32 %v882, %v948
          %v980 = vsub.f32 %v883, %v948
          %v981 = vmul.f32 %v949, %v949
          %v982 = vmul.f32 %v950, %v950
          %v983 = vmul.f32 %v951, %v951
          %v984 = vmul.f32 %v952, %v952
          %v985 = vmul.f32 %v953, %v953
          %v986 = vmul.f32 %v954, %v954
          %v987 = vmul.f32 %v955, %v955
          %v988 = vmul.f32 %v956, %v956
          %v989 = vmul.f32 %v957, %v957
          %v990 = vmul.f32 %v958, %v958
          %v991 = vmul.f32 %v959, %v959
          %v992 = vmul.f32 %v960, %v960
          %v993 = vmul.f32 %v961, %v961
          %v994 = vmul.f32 %v962, %v962
          %v995 = vmul.f32 %v963, %v963
          %v996 = vmul.f32 %v964, %v964
          %v997 = vmul.f32 %v965, %v965
          %v998 = vmul.f32 %v966, %v966
          %v999 = vmul.f32 %v967, %v967
          %v1000 = vmul.f32 %v968, %v968
          %v1001 = vmul.f32 %v969, %v969
          %v1002 = vmul.f32 %v970, %v970
          %v1003 = vmul.f32 %v971, %v971
          %v1004 = vmul.f32 %v972, %v972
          %v1005 = vmul.f32 %v973, %v973
          %v1006 = vmul.f32 %v974, %v974
          %v1007 = vmul.f32 %v975, %v975
          %v1008 = vmul.f32 %v976, %v976
          %v1009 = vmul.f32 %v977, %v977
          %v1010 = vmul.f32 %v978, %v978
          %v1011 = vmul.f32 %v979, %v979
          %v1012 = vmul.f32 %v980, %v980
          %v1013 = vadd.f32 %v981, %v982
          %1014 = vadd.xlane.f32.xlu0 %v1013
          %v1015 = vpop.xlane.xlu0 %1014
          %v1016 = vadd.f32 %v983, %v984
          %1017 = vadd.xlane.f32.xlu0 %v1016
          %v1018 = vpop.xlane.xlu0 %1017
          %v1019 = vadd.f32 %v985, %v986
          %1020 = vadd.xlane.f32.xlu0 %v1019
          %v1021 = vpop.xlane.xlu0 %1020
          %v1022 = vadd.f32 %v987, %v988
          %1023 = vadd.xlane.f32.xlu0 %v1022
          %v1024 = vpop.xlane.xlu0 %1023
          %v1025 = vadd.f32 %v989, %v990
          %1026 = vadd.xlane.f32.xlu0 %v1025
          %v1027 = vpop.xlane.xlu0 %1026
          %v1028 = vadd.f32 %v991, %v992
          %1029 = vadd.xlane.f32.xlu0 %v1028
          %v1030 = vpop.xlane.xlu0 %1029
          %v1031 = vadd.f32 %v993, %v994
          %1032 = vadd.xlane.f32.xlu0 %v1031
          %v1033 = vpop.xlane.xlu0 %1032
          %v1034 = vadd.f32 %v995, %v996
          %1035 = vadd.xlane.f32.xlu0 %v1034
          %v1036 = vpop.xlane.xlu0 %1035
          %v1037 = vadd.f32 %v997, %v998
          %1038 = vadd.xlane.f32.xlu0 %v1037
          %v1039 = vpop.xlane.xlu0 %1038
          %v1040 = vadd.f32 %v999, %v1000
          %1041 = vadd.xlane.f32.xlu0 %v1040
          %v1042 = vpop.xlane.xlu0 %1041
          %v1043 = vadd.f32 %v1001, %v1002
          %1044 = vadd.xlane.f32.xlu0 %v1043
          %v1045 = vpop.xlane.xlu0 %1044
          %v1046 = vadd.f32 %v1003, %v1004
          %1047 = vadd.xlane.f32.xlu0 %v1046
          %v1048 = vpop.xlane.xlu0 %1047
          %v1049 = vadd.f32 %v1005, %v1006
          %1050 = vadd.xlane.f32.xlu0 %v1049
          %v1051 = vpop.xlane.xlu0 %1050
          %v1052 = vadd.f32 %v1007, %v1008
          %1053 = vadd.xlane.f32.xlu0 %v1052
          %v1054 = vpop.xlane.xlu0 %1053
          %v1055 = vadd.f32 %v1009, %v1010
          %1056 = vadd.xlane.f32.xlu0 %v1055
          %v1057 = vpop.xlane.xlu0 %1056
          %v1058 = vadd.f32 %v1011, %v1012
          %1059 = vadd.xlane.f32.xlu0 %v1058
          %v1060 = vpop.xlane.xlu0 %1059
          %v1061 = vmul.f32 %v1015, %v932
          %v1062 = vmul.f32 %v1018, %v932
          %v1063 = vmul.f32 %v1021, %v932
          %v1064 = vmul.f32 %v1024, %v932
          %v1065 = vmul.f32 %v1027, %v932
          %v1066 = vmul.f32 %v1030, %v932
          %v1067 = vmul.f32 %v1033, %v932
          %v1068 = vmul.f32 %v1036, %v932
          %v1069 = vmul.f32 %v1039, %v932
          %v1070 = vmul.f32 %v1042, %v932
          %v1071 = vmul.f32 %v1045, %v932
          %v1072 = vmul.f32 %v1048, %v932
          %v1073 = vmul.f32 %v1051, %v932
          %v1074 = vmul.f32 %v1054, %v932
          %v1075 = vmul.f32 %v1057, %v932
          %v1076 = vmul.f32 %v1060, %v932
          %v1077 = vadd.f32 %v1061, 1e-05
          %v1078 = vadd.f32 %v1062, 1e-05
          %v1079 = vadd.f32 %v1063, 1e-05
          %v1080 = vadd.f32 %v1064, 1e-05
          %v1081 = vadd.f32 %v1065, 1e-05
          %v1082 = vadd.f32 %v1066, 1e-05
          %v1083 = vadd.f32 %v1067, 1e-05
          %v1084 = vadd.f32 %v1068, 1e-05
          %v1085 = vadd.f32 %v1069, 1e-05
          %v1086 = vadd.f32 %v1070, 1e-05
          %v1087 = vadd.f32 %v1071, 1e-05
          %v1088 = vadd.f32 %v1072, 1e-05
          %v1089 = vadd.f32 %v1073, 1e-05
          %v1090 = vadd.f32 %v1074, 1e-05
          %v1091 = vadd.f32 %v1075, 1e-05
          %v1092 = vadd.f32 %v1076, 1e-05
          %v1093 = vrsqrt.pop %v1077
          %v1094 = vrsqrt.pop %v1078
          %v1095 = vrsqrt.pop %v1079
          %v1096 = vrsqrt.pop %v1080
          %v1097 = vrsqrt.pop %v1081
          %v1098 = vrsqrt.pop %v1082
          %v1099 = vrsqrt.pop %v1083
          %v1100 = vrsqrt.pop %v1084
          %v1101 = vrsqrt.pop %v1085
          %v1102 = vrsqrt.pop %v1086
          %v1103 = vrsqrt.pop %v1087
          %v1104 = vrsqrt.pop %v1088
          %v1105 = vrsqrt.pop %v1089
          %v1106 = vrsqrt.pop %v1090
          %v1107 = vrsqrt.pop %v1091
          %v1108 = vrsqrt.pop %v1092
          %v1109 = vmul.f32 %v949, %v1093
          %v1110 = vmul.f32 %v950, %v1093
          %v1111 = vmul.f32 %v951, %v1094
          %v1112 = vmul.f32 %v952, %v1094
          %v1113 = vmul.f32 %v953, %v1095
          %v1114 = vmul.f32 %v954, %v1095
          %v1115 = vmul.f32 %v955, %v1096
          %v1116 = vmul.f32 %v956, %v1096
          %v1117 = vmul.f32 %v957, %v1097
          %v1118 = vmul.f32 %v958, %v1097
          %v1119 = vmul.f32 %v959, %v1098
          %v1120 = vmul.f32 %v960, %v1098
          %v1121 = vmul.f32 %v961, %v1099
          %v1122 = vmul.f32 %v962, %v1099
          %v1123 = vmul.f32 %v963, %v1100
          %v1124 = vmul.f32 %v964, %v1100
          %v1125 = vmul.f32 %v965, %v1101
          %v1126 = vmul.f32 %v966, %v1101
          %v1127 = vmul.f32 %v967, %v1102
          %v1128 = vmul.f32 %v968, %v1102
          %v1129 = vmul.f32 %v969, %v1103
          %v1130 = vmul.f32 %v970, %v1103
          %v1131 = vmul.f32 %v971, %v1104
          %v1132 = vmul.f32 %v972, %v1104
          %v1133 = vmul.f32 %v973, %v1105
          %v1134 = vmul.f32 %v974, %v1105
          %v1135 = vmul.f32 %v975, %v1106
          %v1136 = vmul.f32 %v976, %v1106
          %v1137 = vmul.f32 %v977, %v1107
          %v1138 = vmul.f32 %v978, %v1107
          %v1139 = vmul.f32 %v979, %v1108
          %v1140 = vmul.f32 %v980, %v1108
          %v1141 = vld [vmem:[%s3] sm:$0x3]
          %v1143 = vlaneseq
          %v1144 = vshrl.u32 %v1143, 7
          %v1145 = vsub.s32 0, %v1144
          %v1146 = vrot.slane %v1141, %v1145
          %v1147 = vlaneseq
          %v1148 = vshrl.u32 %v1147, 7
          %v1149 = vsub.s32 1, %v1148
          %v1150 = vrot.slane %v1141, %v1149
          %v1153 = vmul.f32 %v1109, %v1146
          %v1154 = vmul.f32 %v1110, %v1150
          %v1155 = vmul.f32 %v1111, %v1146
          %v1156 = vmul.f32 %v1112, %v1150
          %v1157 = vmul.f32 %v1113, %v1146
          %v1158 = vmul.f32 %v1114, %v1150
          %v1159 = vmul.f32 %v1115, %v1146
          %v1160 = vmul.f32 %v1116, %v1150
          %v1161 = vmul.f32 %v1117, %v1146
          %v1162 = vmul.f32 %v1118, %v1150
          %v1163 = vmul.f32 %v1119, %v1146
          %v1164 = vmul.f32 %v1120, %v1150
          %v1165 = vmul.f32 %v1121, %v1146
          %v1166 = vmul.f32 %v1122, %v1150
          %v1167 = vmul.f32 %v1123, %v1146
          %v1168 = vmul.f32 %v1124, %v1150
          %v1169 = vmul.f32 %v1125, %v1146
          %v1170 = vmul.f32 %v1126, %v1150
          %v1171 = vmul.f32 %v1127, %v1146
          %v1172 = vmul.f32 %v1128, %v1150
          %v1173 = vmul.f32 %v1129, %v1146
          %v1174 = vmul.f32 %v1130, %v1150
          %v1175 = vmul.f32 %v1131, %v1146
          %v1176 = vmul.f32 %v1132, %v1150
          %v1177 = vmul.f32 %v1133, %v1146
          %v1178 = vmul.f32 %v1134, %v1150
          %v1179 = vmul.f32 %v1135, %v1146
          %v1180 = vmul.f32 %v1136, %v1150
          %v1181 = vmul.f32 %v1137, %v1146
          %v1182 = vmul.f32 %v1138, %v1150
          %v1183 = vmul.f32 %v1139, %v1146
          %v1184 = vmul.f32 %v1140, %v1150
          %v1185 = vld [vmem:[%s4] sm:$0x3]
          %v1187 = vlaneseq
          %v1188 = vshrl.u32 %v1187, 7
          %v1189 = vsub.s32 0, %v1188
          %v1190 = vrot.slane %v1185, %v1189
          %v1191 = vlaneseq
          %v1192 = vshrl.u32 %v1191, 7
          %v1193 = vsub.s32 1, %v1192
          %v1194 = vrot.slane %v1185, %v1193
          %v1197 = vadd.f32 %v1153, %v1190
          %v1198 = vadd.f32 %v1154, %v1194
          %v1199 = vadd.f32 %v1155, %v1190
          %v1200 = vadd.f32 %v1156, %v1194
          %v1201 = vadd.f32 %v1157, %v1190
          %v1202 = vadd.f32 %v1158, %v1194
          %v1203 = vadd.f32 %v1159, %v1190
          %v1204 = vadd.f32 %v1160, %v1194
          %v1205 = vadd.f32 %v1161, %v1190
          %v1206 = vadd.f32 %v1162, %v1194
          %v1207 = vadd.f32 %v1163, %v1190
          %v1208 = vadd.f32 %v1164, %v1194
          %v1209 = vadd.f32 %v1165, %v1190
          %v1210 = vadd.f32 %v1166, %v1194
          %v1211 = vadd.f32 %v1167, %v1190
          %v1212 = vadd.f32 %v1168, %v1194
          %v1213 = vadd.f32 %v1169, %v1190
          %v1214 = vadd.f32 %v1170, %v1194
          %v1215 = vadd.f32 %v1171, %v1190
          %v1216 = vadd.f32 %v1172, %v1194
          %v1217 = vadd.f32 %v1173, %v1190
          %v1218 = vadd.f32 %v1174, %v1194
          %v1219 = vadd.f32 %v1175, %v1190
          %v1220 = vadd.f32 %v1176, %v1194
          %v1221 = vadd.f32 %v1177, %v1190
          %v1222 = vadd.f32 %v1178, %v1194
          %v1223 = vadd.f32 %v1179, %v1190
          %v1224 = vadd.f32 %v1180, %v1194
          %v1225 = vadd.f32 %v1181, %v1190
          %v1226 = vadd.f32 %v1182, %v1194
          %v1227 = vadd.f32 %v1183, %v1190
          %v1228 = vadd.f32 %v1184, %v1194
          %1229 = vst [vmem:[%s299] sm:$0xff] %v1197
          %1230 = vst [vmem:[%s299 + $0x8] sm:$0xff] %v1198
          %1231 = vst [vmem:[%s299 + $0x10] sm:$0xff] %v1199
          %1232 = vst [vmem:[%s299 + $0x18] sm:$0xff] %v1200
          %1233 = vst [vmem:[%s299 + $0x20] sm:$0xff] %v1201
          %1234 = vst [vmem:[%s299 + $0x28] sm:$0xff] %v1202
          %1235 = vst [vmem:[%s299 + $0x30] sm:$0xff] %v1203
          %1236 = vst [vmem:[%s299 + $0x38] sm:$0xff] %v1204
          %1237 = vst [vmem:[%s299 + $0x40] sm:$0xff] %v1205
          %1238 = vst [vmem:[%s299 + $0x48] sm:$0xff] %v1206
          %1239 = vst [vmem:[%s299 + $0x50] sm:$0xff] %v1207
          %1240 = vst [vmem:[%s299 + $0x58] sm:$0xff] %v1208
          %1241 = vst [vmem:[%s299 + $0x60] sm:$0xff] %v1209
          %1242 = vst [vmem:[%s299 + $0x68] sm:$0xff] %v1210
          %1243 = vst [vmem:[%s299 + $0x70] sm:$0xff] %v1211
          %1244 = vst [vmem:[%s299 + $0x78] sm:$0xff] %v1212
          %1245 = vst [vmem:[%s299 + $0x80] sm:$0xff] %v1213
          %1246 = vst [vmem:[%s299 + $0x88] sm:$0xff] %v1214
          %1247 = vst [vmem:[%s299 + $0x90] sm:$0xff] %v1215
          %1248 = vst [vmem:[%s299 + $0x98] sm:$0xff] %v1216
          %1249 = vst [vmem:[%s299 + $0xa0] sm:$0xff] %v1217
          %1250 = vst [vmem:[%s299 + $0xa8] sm:$0xff] %v1218
          %1251 = vst [vmem:[%s299 + $0xb0] sm:$0xff] %v1219
          %1252 = vst [vmem:[%s299 + $0xb8] sm:$0xff] %v1220
          %1253 = vst [vmem:[%s299 + $0xc0] sm:$0xff] %v1221
          %1254 = vst [vmem:[%s299 + $0xc8] sm:$0xff] %v1222
          %1255 = vst [vmem:[%s299 + $0xd0] sm:$0xff] %v1223
          %1256 = vst [vmem:[%s299 + $0xd8] sm:$0xff] %v1224
          %1257 = vst [vmem:[%s299 + $0xe0] sm:$0xff] %v1225
          %1258 = vst [vmem:[%s299 + $0xe8] sm:$0xff] %v1226
          %1259 = vst [vmem:[%s299 + $0xf0] sm:$0xff] %v1227
          %1260 = vst [vmem:[%s299 + $0xf8] sm:$0xff] %v1228
        $region56: #{tpu_custom_call.1} parent=39 // pred_fallthru
          _
        %s1261 = sand.u32 %s162, 1
        %s1262 = scalar_lea.sflag [#allocation5], %s1261
        %s1263 = sand.u32 %s162, 1
        %s1264 = smul.addr %s1263, 256
        %s1265 = scalar_lea.vmem [#allocation8], %s1264
        // Predicated region
        $region57: #{tpu_custom_call.1} parent=39 // pred_check
          %p1266 = pneg %p172
        $region58: #{tpu_custom_call.1} parent=39 // pred_check_branch
          %1268 = sbr.rel (%p1266) target = $region60
        $region59: #{tpu_custom_call.1} parent=39 // pred_region
          %s1269 = smul.u32 16, %s29
          %s1271 = ssub.s32 4096, 4096
          %1272 = vsyncadd %s1262, %s1271
          %s1273 = smul.addr %s1269, 2
          %s1274 = smul.addr %s1273, 128
          %s1275 = scalar_lea.hbm %s5, %s1274
          %s1276 = sshll.u32 %s1265, 4
          %s1277 = int_to_ptr.vmem [resolvable:$true] %s1276
          %1282 = dma.vmem_to_hbm [thread:$0]  %s1277, 4096, %s1275, %s1262, 256, 256, 16
        $region60: #{tpu_custom_call.1} parent=39 // pred_fallthru
          _
      $region40: #{tpu_custom_call.1} parent=5 // pred_fallthru
        _
      %p1283 = scmp.le.s32.totalorder 2, %s20
      // Predicated region
      $region61: #{tpu_custom_call.1} parent=5 // pred_check
        %p1284 = pneg %p1283
      $region62: #{tpu_custom_call.1} parent=5 // pred_check_branch
        %1286 = sbr.rel (%p1284) target = $region64
      $region63: #{tpu_custom_call.1} parent=5 // pred_region
        %s1287 = ssub.s32 %s20, 2
        // Predicated region
        $region65: #{tpu_custom_call.1} parent=63 // pred_check
          %p1288 = pneg %p178
        $region66: #{tpu_custom_call.1} parent=63 // pred_check_branch
          %1290 = sbr.rel (%p1288) target = $region68
        $region67: #{tpu_custom_call.1} parent=63 // pred_region
          %s1291 = sand.u32 %s163, 1
          %s1292 = scalar_lea.sflag [#allocation5], %s1291
          %s1293 = sand.u32 %s163, 1
          %s1294 = smul.addr %s1293, 256
          %s1295 = scalar_lea.vmem [#allocation8], %s1294
          %1296 = dma.done %s1292, 4096
        $region68: #{tpu_custom_call.1} parent=63 // pred_fallthru
          _
      $region64: #{tpu_custom_call.1} parent=5 // pred_fallthru
        _
    $region6: #{tpu_custom_call.1} parent=1 // loop_footer
      %s24 = sadd.s32 1, %s20
    $region7: #{tpu_custom_call.1} parent=1 // loop_footer_branch
      %19 = sbr.rel target = $region3
    $region8: #{tpu_custom_call.1} parent=1 // loop_exit
      _
    %1297 = vsyncpa [#allocation4], 1
    %s1298 = scalar_lea.sflag [#allocation4], 1
    %1299 = vsyncpa %s1298, 1
    %1300 = vsyncpa [#allocation7], 1
    %s1301 = scalar_lea.sflag [#allocation7], 1
    %1302 = vsyncpa %s1301, 1
    %1303 = vsyncpa [#allocation5], 1
    %s1304 = scalar_lea.sflag [#allocation5], 1
    %1305 = vsyncpa %s1304, 1

</llo_original>
